<compile_context>
chip_gen: v5e
topology: v5e:2x2
jax: 0.10.0
libtpu: 0.0.40
codegen_flags: <defaults>
</compile_context>

<pallas_src>
import jax
import jax.numpy as jnp
from jax.experimental import pallas as pl
from jax.experimental.pallas import tpu as pltpu


def _conv1x1_matmul_kernel(w_ref, x_ref, o_ref):
    # w: bf16 [Cout, Cin] (persisted param), x: f32 [Cin, H*W].
    # Cast x to bf16 in-VMEM (no HBM traffic), single bf16 MXU matmul with
    # f32 accumulation, f32 output.
    x_bf16 = x_ref[...].astype(jnp.bfloat16)
    o_ref[...] = jnp.dot(w_ref[...], x_bf16, preferred_element_type=jnp.float32)


def prepare_conv_weight(weight_oihw: jax.Array) -> jax.Array:
    """One-time parameter prep: OIHW f32 [Cout, Cin, 1, 1] -> persisted bf16 [Cout, Cin]."""
    cout, cin, kh, kw = weight_oihw.shape
    assert kh == 1 and kw == 1, "kernel is specialized for 1x1 convolution"
    return weight_oihw.reshape(cout, cin).astype(jnp.bfloat16)


def conv2d_1x1(x_nchw: jax.Array, w_mat_bf16: jax.Array) -> jax.Array:
    """1x1 conv, stride 1, no bias.

    x_nchw:     f32 [1, Cin, H, W]   (kept f32 straight into the kernel)
    w_mat_bf16: bf16 [Cout, Cin]     (pre-persisted via prepare_conv_weight)
    returns:    f32 [1, Cout, H, W]
    """
    n, cin, h, w = x_nchw.shape
    cout = w_mat_bf16.shape[0]
    assert n == 1, "kernel is specialized for the module's batch size of 1"
    hw = h * w

    # Free (transpose-less) reshape into the flipped matmul layout.
    x_mat = x_nchw.reshape(cin, hw)  # f32 [Cin, H*W]

    flops = 2 * cout * cin * hw
    bytes_accessed = x_mat.size * 4 + w_mat_bf16.size * 2 + cout * hw * 4

    out_mat = pl.pallas_call(
        _conv1x1_matmul_kernel,
        out_shape=jax.ShapeDtypeStruct((cout, hw), jnp.float32),
        in_specs=[
            pl.BlockSpec(memory_space=pltpu.MemorySpace.VMEM),
            pl.BlockSpec(memory_space=pltpu.MemorySpace.VMEM),
        ],
        out_specs=pl.BlockSpec(memory_space=pltpu.MemorySpace.VMEM),
        cost_estimate=pl.CostEstimate(
            flops=flops, transcendentals=0, bytes_accessed=bytes_accessed
        ),
    )(w_mat_bf16, x_mat)

    # Free reshape back to NCHW: [Cout, H*W] -> [1, Cout, H, W].
    return out_mat.reshape(1, cout, h, w)


if __name__ == "__main__":
    key = jax.random.PRNGKey(0)
    kx, kw = jax.random.split(key)

    # Shapes implied by the module: Conv2d(1056, 176, k=1, stride=1, bias=False)
    x = jax.random.normal(kx, (1, 1056, 14, 14), dtype=jnp.float32)
    weight = (jax.random.normal(kw, (176, 1056, 1, 1), dtype=jnp.float32)
              * (1.0 / jnp.sqrt(1056.0)))

    # One-time parameter prep (persisted bf16 weight, outside the per-call path).
    w_mat = prepare_conv_weight(weight)

    out = jax.jit(conv2d_1x1)(x, w_mat)
    out = jax.block_until_ready(out)
    assert out.shape == (1, 176, 14, 14), out.shape

    # Reference: the true f32 conv (the PyTorch module's math).  The only
    # rounding in the kernel is the persisted bf16 weight and the in-VMEM bf16
    # cast of x, so a 2e-2 tolerance against the exact f32 answer holds.
    ref = (weight.reshape(176, 1056) @ x.reshape(1056, 196)).reshape(1, 176, 14, 14)
    assert jnp.allclose(out, ref, atol=2e-2, rtol=2e-2), float(jnp.max(jnp.abs(out - ref)))

    print("KERNEL_OK")
</pallas_src>

<mosaic_0001>
module attributes {stable_mosaic.version = 11 : i64} {
  func.func @_conv1x1_matmul_kernel(%arg0: memref<176x1056xbf16, #tpu.memory_space<vmem>>, %arg1: memref<1056x196xf32, #tpu.memory_space<vmem>>, %arg2: memref<176x196xf32, #tpu.memory_space<vmem>>) attributes {dimension_semantics = [], scalar_prefetch = 0 : i64, scratch_operands = 0 : i64, tpu.core_type = #tpu.core_type<tc>} {
    %c0 = arith.constant 0 : index
    %c0_0 = arith.constant 0 : index
    %0 = vector.load %arg1[%c0, %c0_0] : memref<1056x196xf32, #tpu.memory_space<vmem>>, vector<1056x196xf32>
    %1 = arith.truncf %0 : vector<1056x196xf32> to vector<1056x196xbf16>
    %c0_1 = arith.constant 0 : index
    %c0_2 = arith.constant 0 : index
    %2 = vector.load %arg0[%c0_1, %c0_2] : memref<176x1056xbf16, #tpu.memory_space<vmem>>, vector<176x1056xbf16>
    %cst = arith.constant dense<0.000000e+00> : vector<176x196xf32>
    %3 = tpu.matmul %2, %1, %cst {dimension_numbers = #tpu.dot_dimension_numbers<[1], [0], [0], [1], [0, 0, 1, 1], [], []>} : vector<176x1056xbf16>, vector<1056x196xbf16>, vector<176x196xf32> -> vector<176x196xf32>
    %c0_3 = arith.constant 0 : index
    %c0_4 = arith.constant 0 : index
    %4 = vector.load %arg2[%c0_3, %c0_4] : memref<176x196xf32, #tpu.memory_space<vmem>>, vector<176x196xf32>
    tpu.vector_store %arg2[%c0_3, %c0_4], %3 {strides = array<i32>} : memref<176x196xf32, #tpu.memory_space<vmem>>, vector<176x196xf32>,
    return
  }
}

</mosaic_0001>

<llo_original>
// kernel: conv2d_1x1.1
$region0: #{conv2d_1x1.1}
  #allocation0 [shape = 'u32[]', space=smem, size = 0x4, offset = 0x4, fixed_abs, tag = 'smem constant byte address 0x4 - core index']
  #allocation1 [shape = 'u32[72,128]{1,0:T(1,128)}', space=vmem, size = 0x9000, scoped, tag = 'internal scratch']
  %s0 = inlined_call_operand.vmem [shape: bf16[176,1056], index: 0, kind: input, shape index: {}]
  %s1 = inlined_call_operand.vmem [shape: f32[1056,196], index: 1, kind: input, shape index: {}]
  %s2 = inlined_call_operand.vmem [shape: f32[176,196], index: 2, kind: output, shape index: {}]
  %s3 = sld [smem:[#allocation0]]
  $region18: #{conv2d_1x1.1} parent=0
    _
  %s5 = ssub.s32 1, %s3
  %s6 = scalar_select 0, %s5, %s3
  // Predicated region
  $region2: #{conv2d_1x1.1} parent=0 // pred_check
    _
  $region3: #{conv2d_1x1.1} parent=0 // pred_check_branch
    %8 = sbr.rel (0) target = $region5
  $region4: #{conv2d_1x1.1} parent=0 // pred_region
    _
  $region5: #{conv2d_1x1.1} parent=0 // pred_fallthru
    _
  // Predicated region
  $region6: #{conv2d_1x1.1} parent=0 // pred_check
    _
  $region7: #{conv2d_1x1.1} parent=0 // pred_check_branch
    %10 = sbr.rel (0) target = $region9
  $region8: #{conv2d_1x1.1} parent=0 // pred_region
    _
  $region9: #{conv2d_1x1.1} parent=0 // pred_fallthru
    _
  %v12 = vld [vmem:[%s1] sm:$0xff]
  %v13 = vld [vmem:[%s1 + $0x8] sm:$0xff]
  %v14 = vld [vmem:[%s1 + $0x10] sm:$0xff]
  %v15 = vld [vmem:[%s1 + $0x18] sm:$0xff]
  %v16 = vld [vmem:[%s1 + $0x20] sm:$0xff]
  %v17 = vld [vmem:[%s1 + $0x28] sm:$0xff]
  %v18 = vld [vmem:[%s1 + $0x30] sm:$0xff]
  %v19 = vld [vmem:[%s1 + $0x38] sm:$0xff]
  %v20 = vld [vmem:[%s1 + $0x40] sm:$0xff]
  %v21 = vld [vmem:[%s1 + $0x48] sm:$0xff]
  %v22 = vld [vmem:[%s1 + $0x50] sm:$0xff]
  %v23 = vld [vmem:[%s1 + $0x58] sm:$0xff]
  %v24 = vld [vmem:[%s1 + $0x60] sm:$0xff]
  %v25 = vld [vmem:[%s1 + $0x68] sm:$0xff]
  %v26 = vld [vmem:[%s1 + $0x70] sm:$0xff]
  %v27 = vld [vmem:[%s1 + $0x78] sm:$0xff]
  %v28 = vld [vmem:[%s1 + $0x80] sm:$0xff]
  %v29 = vld [vmem:[%s1 + $0x88] sm:$0xff]
  %v30 = vld [vmem:[%s1 + $0x90] sm:$0xff]
  %v31 = vld [vmem:[%s1 + $0x98] sm:$0xff]
  %v32 = vld [vmem:[%s1 + $0xa0] sm:$0xff]
  %v33 = vld [vmem:[%s1 + $0xa8] sm:$0xff]
  %v34 = vld [vmem:[%s1 + $0xb0] sm:$0xff]
  %v35 = vld [vmem:[%s1 + $0xb8] sm:$0xff]
  %v36 = vld [vmem:[%s1 + $0xc0] sm:$0xff]
  %v37 = vld [vmem:[%s1 + $0xc8] sm:$0xff]
  %v38 = vld [vmem:[%s1 + $0xd0] sm:$0xff]
  %v39 = vld [vmem:[%s1 + $0xd8] sm:$0xff]
  %v40 = vld [vmem:[%s1 + $0xe0] sm:$0xff]
  %v41 = vld [vmem:[%s1 + $0xe8] sm:$0xff]
  %v42 = vld [vmem:[%s1 + $0xf0] sm:$0xff]
  %v43 = vld [vmem:[%s1 + $0xf8] sm:$0xff]
  %v44 = vld [vmem:[%s1 + $0x100] sm:$0xff]
  %v45 = vld [vmem:[%s1 + $0x108] sm:$0xff]
  %v46 = vld [vmem:[%s1 + $0x110] sm:$0xff]
  %v47 = vld [vmem:[%s1 + $0x118] sm:$0xff]
  %v48 = vld [vmem:[%s1 + $0x120] sm:$0xff]
  %v49 = vld [vmem:[%s1 + $0x128] sm:$0xff]
  %v50 = vld [vmem:[%s1 + $0x130] sm:$0xff]
  %v51 = vld [vmem:[%s1 + $0x138] sm:$0xff]
  %v52 = vld [vmem:[%s1 + $0x140] sm:$0xff]
  %v53 = vld [vmem:[%s1 + $0x148] sm:$0xff]
  %v54 = vld [vmem:[%s1 + $0x150] sm:$0xff]
  %v55 = vld [vmem:[%s1 + $0x158] sm:$0xff]
  %v56 = vld [vmem:[%s1 + $0x160] sm:$0xff]
  %v57 = vld [vmem:[%s1 + $0x168] sm:$0xff]
  %v58 = vld [vmem:[%s1 + $0x170] sm:$0xff]
  %v59 = vld [vmem:[%s1 + $0x178] sm:$0xff]
  %v60 = vld [vmem:[%s1 + $0x180] sm:$0xff]
  %v61 = vld [vmem:[%s1 + $0x188] sm:$0xff]
  %v62 = vld [vmem:[%s1 + $0x190] sm:$0xff]
  %v63 = vld [vmem:[%s1 + $0x198] sm:$0xff]
  %v64 = vld [vmem:[%s1 + $0x1a0] sm:$0xff]
  %v65 = vld [vmem:[%s1 + $0x1a8] sm:$0xff]
  %v66 = vld [vmem:[%s1 + $0x1b0] sm:$0xff]
  %v67 = vld [vmem:[%s1 + $0x1b8] sm:$0xff]
  %v68 = vld [vmem:[%s1 + $0x1c0] sm:$0xff]
  %v69 = vld [vmem:[%s1 + $0x1c8] sm:$0xff]
  %v70 = vld [vmem:[%s1 + $0x1d0] sm:$0xff]
  %v71 = vld [vmem:[%s1 + $0x1d8] sm:$0xff]
  %v72 = vld [vmem:[%s1 + $0x1e0] sm:$0xff]
  %v73 = vld [vmem:[%s1 + $0x1e8] sm:$0xff]
  %v74 = vld [vmem:[%s1 + $0x1f0] sm:$0xff]
  %v75 = vld [vmem:[%s1 + $0x1f8] sm:$0xff]
  %v76 = vld [vmem:[%s1 + $0x200] sm:$0xff]
  %v77 = vld [vmem:[%s1 + $0x208] sm:$0xff]
  %v78 = vld [vmem:[%s1 + $0x210] sm:$0xff]
  %v79 = vld [vmem:[%s1 + $0x218] sm:$0xff]
  %v80 = vld [vmem:[%s1 + $0x220] sm:$0xff]
  %v81 = vld [vmem:[%s1 + $0x228] sm:$0xff]
  %v82 = vld [vmem:[%s1 + $0x230] sm:$0xff]
  %v83 = vld [vmem:[%s1 + $0x238] sm:$0xff]
  %v84 = vld [vmem:[%s1 + $0x240] sm:$0xff]
  %v85 = vld [vmem:[%s1 + $0x248] sm:$0xff]
  %v86 = vld [vmem:[%s1 + $0x250] sm:$0xff]
  %v87 = vld [vmem:[%s1 + $0x258] sm:$0xff]
  %v88 = vld [vmem:[%s1 + $0x260] sm:$0xff]
  %v89 = vld [vmem:[%s1 + $0x268] sm:$0xff]
  %v90 = vld [vmem:[%s1 + $0x270] sm:$0xff]
  %v91 = vld [vmem:[%s1 + $0x278] sm:$0xff]
  %v92 = vld [vmem:[%s1 + $0x280] sm:$0xff]
  %v93 = vld [vmem:[%s1 + $0x288] sm:$0xff]
  %v94 = vld [vmem:[%s1 + $0x290] sm:$0xff]
  %v95 = vld [vmem:[%s1 + $0x298] sm:$0xff]
  %v96 = vld [vmem:[%s1 + $0x2a0] sm:$0xff]
  %v97 = vld [vmem:[%s1 + $0x2a8] sm:$0xff]
  %v98 = vld [vmem:[%s1 + $0x2b0] sm:$0xff]
  %v99 = vld [vmem:[%s1 + $0x2b8] sm:$0xff]
  %v100 = vld [vmem:[%s1 + $0x2c0] sm:$0xff]
  %v101 = vld [vmem:[%s1 + $0x2c8] sm:$0xff]
  %v102 = vld [vmem:[%s1 + $0x2d0] sm:$0xff]
  %v103 = vld [vmem:[%s1 + $0x2d8] sm:$0xff]
  %v104 = vld [vmem:[%s1 + $0x2e0] sm:$0xff]
  %v105 = vld [vmem:[%s1 + $0x2e8] sm:$0xff]
  %v106 = vld [vmem:[%s1 + $0x2f0] sm:$0xff]
  %v107 = vld [vmem:[%s1 + $0x2f8] sm:$0xff]
  %v108 = vld [vmem:[%s1 + $0x300] sm:$0xff]
  %v109 = vld [vmem:[%s1 + $0x308] sm:$0xff]
  %v110 = vld [vmem:[%s1 + $0x310] sm:$0xff]
  %v111 = vld [vmem:[%s1 + $0x318] sm:$0xff]
  %v112 = vld [vmem:[%s1 + $0x320] sm:$0xff]
  %v113 = vld [vmem:[%s1 + $0x328] sm:$0xff]
  %v114 = vld [vmem:[%s1 + $0x330] sm:$0xff]
  %v115 = vld [vmem:[%s1 + $0x338] sm:$0xff]
  %v116 = vld [vmem:[%s1 + $0x340] sm:$0xff]
  %v117 = vld [vmem:[%s1 + $0x348] sm:$0xff]
  %v118 = vld [vmem:[%s1 + $0x350] sm:$0xff]
  %v119 = vld [vmem:[%s1 + $0x358] sm:$0xff]
  %v120 = vld [vmem:[%s1 + $0x360] sm:$0xff]
  %v121 = vld [vmem:[%s1 + $0x368] sm:$0xff]
  %v122 = vld [vmem:[%s1 + $0x370] sm:$0xff]
  %v123 = vld [vmem:[%s1 + $0x378] sm:$0xff]
  %v124 = vld [vmem:[%s1 + $0x380] sm:$0xff]
  %v125 = vld [vmem:[%s1 + $0x388] sm:$0xff]
  %v126 = vld [vmem:[%s1 + $0x390] sm:$0xff]
  %v127 = vld [vmem:[%s1 + $0x398] sm:$0xff]
  %v128 = vld [vmem:[%s1 + $0x3a0] sm:$0xff]
  %v129 = vld [vmem:[%s1 + $0x3a8] sm:$0xff]
  %v130 = vld [vmem:[%s1 + $0x3b0] sm:$0xff]
  %v131 = vld [vmem:[%s1 + $0x3b8] sm:$0xff]
  %v132 = vld [vmem:[%s1 + $0x3c0] sm:$0xff]
  %v133 = vld [vmem:[%s1 + $0x3c8] sm:$0xff]
  %v134 = vld [vmem:[%s1 + $0x3d0] sm:$0xff]
  %v135 = vld [vmem:[%s1 + $0x3d8] sm:$0xff]
  %v136 = vld [vmem:[%s1 + $0x3e0] sm:$0xff]
  %v137 = vld [vmem:[%s1 + $0x3e8] sm:$0xff]
  %v138 = vld [vmem:[%s1 + $0x3f0] sm:$0xff]
  %v139 = vld [vmem:[%s1 + $0x3f8] sm:$0xff]
  %v140 = vld [vmem:[%s1 + $0x400] sm:$0xff]
  %v141 = vld [vmem:[%s1 + $0x408] sm:$0xff]
  %v142 = vld [vmem:[%s1 + $0x410] sm:$0xff]
  %v143 = vld [vmem:[%s1 + $0x418] sm:$0xff]
  %v144 = vld [vmem:[%s1 + $0x420] sm:$0xff]
  %v145 = vld [vmem:[%s1 + $0x428] sm:$0xff]
  %v146 = vld [vmem:[%s1 + $0x430] sm:$0xff]
  %v147 = vld [vmem:[%s1 + $0x438] sm:$0xff]
  %v148 = vld [vmem:[%s1 + $0x440] sm:$0xff]
  %v149 = vld [vmem:[%s1 + $0x448] sm:$0xff]
  %v150 = vld [vmem:[%s1 + $0x450] sm:$0xff]
  %v151 = vld [vmem:[%s1 + $0x458] sm:$0xff]
  %v152 = vld [vmem:[%s1 + $0x460] sm:$0xff]
  %v153 = vld [vmem:[%s1 + $0x468] sm:$0xff]
  %v154 = vld [vmem:[%s1 + $0x470] sm:$0xff]
  %v155 = vld [vmem:[%s1 + $0x478] sm:$0xff]
  %v156 = vld [vmem:[%s1 + $0x480] sm:$0xff]
  %v157 = vld [vmem:[%s1 + $0x488] sm:$0xff]
  %v158 = vld [vmem:[%s1 + $0x490] sm:$0xff]
  %v159 = vld [vmem:[%s1 + $0x498] sm:$0xff]
  %v160 = vld [vmem:[%s1 + $0x4a0] sm:$0xff]
  %v161 = vld [vmem:[%s1 + $0x4a8] sm:$0xff]
  %v162 = vld [vmem:[%s1 + $0x4b0] sm:$0xff]
  %v163 = vld [vmem:[%s1 + $0x4b8] sm:$0xff]
  %v164 = vld [vmem:[%s1 + $0x4c0] sm:$0xff]
  %v165 = vld [vmem:[%s1 + $0x4c8] sm:$0xff]
  %v166 = vld [vmem:[%s1 + $0x4d0] sm:$0xff]
  %v167 = vld [vmem:[%s1 + $0x4d8] sm:$0xff]
  %v168 = vld [vmem:[%s1 + $0x4e0] sm:$0xff]
  %v169 = vld [vmem:[%s1 + $0x4e8] sm:$0xff]
  %v170 = vld [vmem:[%s1 + $0x4f0] sm:$0xff]
  %v171 = vld [vmem:[%s1 + $0x4f8] sm:$0xff]
  %v172 = vld [vmem:[%s1 + $0x500] sm:$0xff]
  %v173 = vld [vmem:[%s1 + $0x508] sm:$0xff]
  %v174 = vld [vmem:[%s1 + $0x510] sm:$0xff]
  %v175 = vld [vmem:[%s1 + $0x518] sm:$0xff]
  %v176 = vld [vmem:[%s1 + $0x520] sm:$0xff]
  %v177 = vld [vmem:[%s1 + $0x528] sm:$0xff]
  %v178 = vld [vmem:[%s1 + $0x530] sm:$0xff]
  %v179 = vld [vmem:[%s1 + $0x538] sm:$0xff]
  %v180 = vld [vmem:[%s1 + $0x540] sm:$0xff]
  %v181 = vld [vmem:[%s1 + $0x548] sm:$0xff]
  %v182 = vld [vmem:[%s1 + $0x550] sm:$0xff]
  %v183 = vld [vmem:[%s1 + $0x558] sm:$0xff]
  %v184 = vld [vmem:[%s1 + $0x560] sm:$0xff]
  %v185 = vld [vmem:[%s1 + $0x568] sm:$0xff]
  %v186 = vld [vmem:[%s1 + $0x570] sm:$0xff]
  %v187 = vld [vmem:[%s1 + $0x578] sm:$0xff]
  %v188 = vld [vmem:[%s1 + $0x580] sm:$0xff]
  %v189 = vld [vmem:[%s1 + $0x588] sm:$0xff]
  %v190 = vld [vmem:[%s1 + $0x590] sm:$0xff]
  %v191 = vld [vmem:[%s1 + $0x598] sm:$0xff]
  %v192 = vld [vmem:[%s1 + $0x5a0] sm:$0xff]
  %v193 = vld [vmem:[%s1 + $0x5a8] sm:$0xff]
  %v194 = vld [vmem:[%s1 + $0x5b0] sm:$0xff]
  %v195 = vld [vmem:[%s1 + $0x5b8] sm:$0xff]
  %v196 = vld [vmem:[%s1 + $0x5c0] sm:$0xff]
  %v197 = vld [vmem:[%s1 + $0x5c8] sm:$0xff]
  %v198 = vld [vmem:[%s1 + $0x5d0] sm:$0xff]
  %v199 = vld [vmem:[%s1 + $0x5d8] sm:$0xff]
  %v200 = vld [vmem:[%s1 + $0x5e0] sm:$0xff]
  %v201 = vld [vmem:[%s1 + $0x5e8] sm:$0xff]
  %v202 = vld [vmem:[%s1 + $0x5f0] sm:$0xff]
  %v203 = vld [vmem:[%s1 + $0x5f8] sm:$0xff]
  %v204 = vld [vmem:[%s1 + $0x600] sm:$0xff]
  %v205 = vld [vmem:[%s1 + $0x608] sm:$0xff]
  %v206 = vld [vmem:[%s1 + $0x610] sm:$0xff]
  %v207 = vld [vmem:[%s1 + $0x618] sm:$0xff]
  %v208 = vld [vmem:[%s1 + $0x620] sm:$0xff]
  %v209 = vld [vmem:[%s1 + $0x628] sm:$0xff]
  %v210 = vld [vmem:[%s1 + $0x630] sm:$0xff]
  %v211 = vld [vmem:[%s1 + $0x638] sm:$0xff]
  %v212 = vld [vmem:[%s1 + $0x640] sm:$0xff]
  %v213 = vld [vmem:[%s1 + $0x648] sm:$0xff]
  %v214 = vld [vmem:[%s1 + $0x650] sm:$0xff]
  %v215 = vld [vmem:[%s1 + $0x658] sm:$0xff]
  %v216 = vld [vmem:[%s1 + $0x660] sm:$0xff]
  %v217 = vld [vmem:[%s1 + $0x668] sm:$0xff]
  %v218 = vld [vmem:[%s1 + $0x670] sm:$0xff]
  %v219 = vld [vmem:[%s1 + $0x678] sm:$0xff]
  %v220 = vld [vmem:[%s1 + $0x680] sm:$0xff]
  %v221 = vld [vmem:[%s1 + $0x688] sm:$0xff]
  %v222 = vld [vmem:[%s1 + $0x690] sm:$0xff]
  %v223 = vld [vmem:[%s1 + $0x698] sm:$0xff]
  %v224 = vld [vmem:[%s1 + $0x6a0] sm:$0xff]
  %v225 = vld [vmem:[%s1 + $0x6a8] sm:$0xff]
  %v226 = vld [vmem:[%s1 + $0x6b0] sm:$0xff]
  %v227 = vld [vmem:[%s1 + $0x6b8] sm:$0xff]
  %v228 = vld [vmem:[%s1 + $0x6c0] sm:$0xff]
  %v229 = vld [vmem:[%s1 + $0x6c8] sm:$0xff]
  %v230 = vld [vmem:[%s1 + $0x6d0] sm:$0xff]
  %v231 = vld [vmem:[%s1 + $0x6d8] sm:$0xff]
  %v232 = vld [vmem:[%s1 + $0x6e0] sm:$0xff]
  %v233 = vld [vmem:[%s1 + $0x6e8] sm:$0xff]
  %v234 = vld [vmem:[%s1 + $0x6f0] sm:$0xff]
  %v235 = vld [vmem:[%s1 + $0x6f8] sm:$0xff]
  %v236 = vld [vmem:[%s1 + $0x700] sm:$0xff]
  %v237 = vld [vmem:[%s1 + $0x708] sm:$0xff]
  %v238 = vld [vmem:[%s1 + $0x710] sm:$0xff]
  %v239 = vld [vmem:[%s1 + $0x718] sm:$0xff]
  %v240 = vld [vmem:[%s1 + $0x720] sm:$0xff]
  %v241 = vld [vmem:[%s1 + $0x728] sm:$0xff]
  %v242 = vld [vmem:[%s1 + $0x730] sm:$0xff]
  %v243 = vld [vmem:[%s1 + $0x738] sm:$0xff]
  %v244 = vld [vmem:[%s1 + $0x740] sm:$0xff]
  %v245 = vld [vmem:[%s1 + $0x748] sm:$0xff]
  %v246 = vld [vmem:[%s1 + $0x750] sm:$0xff]
  %v247 = vld [vmem:[%s1 + $0x758] sm:$0xff]
  %v248 = vld [vmem:[%s1 + $0x760] sm:$0xff]
  %v249 = vld [vmem:[%s1 + $0x768] sm:$0xff]
  %v250 = vld [vmem:[%s1 + $0x770] sm:$0xff]
  %v251 = vld [vmem:[%s1 + $0x778] sm:$0xff]
  %v252 = vld [vmem:[%s1 + $0x780] sm:$0xff]
  %v253 = vld [vmem:[%s1 + $0x788] sm:$0xff]
  %v254 = vld [vmem:[%s1 + $0x790] sm:$0xff]
  %v255 = vld [vmem:[%s1 + $0x798] sm:$0xff]
  %v256 = vld [vmem:[%s1 + $0x7a0] sm:$0xff]
  %v257 = vld [vmem:[%s1 + $0x7a8] sm:$0xff]
  %v258 = vld [vmem:[%s1 + $0x7b0] sm:$0xff]
  %v259 = vld [vmem:[%s1 + $0x7b8] sm:$0xff]
  %v260 = vld [vmem:[%s1 + $0x7c0] sm:$0xff]
  %v261 = vld [vmem:[%s1 + $0x7c8] sm:$0xff]
  %v262 = vld [vmem:[%s1 + $0x7d0] sm:$0xff]
  %v263 = vld [vmem:[%s1 + $0x7d8] sm:$0xff]
  %v264 = vld [vmem:[%s1 + $0x7e0] sm:$0xff]
  %v265 = vld [vmem:[%s1 + $0x7e8] sm:$0xff]
  %v266 = vld [vmem:[%s1 + $0x7f0] sm:$0xff]
  %v267 = vld [vmem:[%s1 + $0x7f8] sm:$0xff]
  %v268 = vld [vmem:[%s1 + $0x800] sm:$0xff]
  %v269 = vld [vmem:[%s1 + $0x808] sm:$0xff]
  %v270 = vld [vmem:[%s1 + $0x810] sm:$0xff]
  %v271 = vld [vmem:[%s1 + $0x818] sm:$0xff]
  %v272 = vld [vmem:[%s1 + $0x820] sm:$0xff]
  %v273 = vld [vmem:[%s1 + $0x828] sm:$0xff]
  %v274 = vld [vmem:[%s1 + $0x830] sm:$0xff]
  %v275 = vld [vmem:[%s1 + $0x838] sm:$0xff]
  %v276 = vpack.c.bf16 %v14, %v12
  %v277 = vpack.c.bf16 %v15, %v13
  %v278 = vpack.c.bf16 %v18, %v16
  %v279 = vpack.c.bf16 %v19, %v17
  %v280 = vpack.c.bf16 %v22, %v20
  %v281 = vpack.c.bf16 %v23, %v21
  %v282 = vpack.c.bf16 %v26, %v24
  %v283 = vpack.c.bf16 %v27, %v25
  %v284 = vpack.c.bf16 %v30, %v28
  %v285 = vpack.c.bf16 %v31, %v29
  %v286 = vpack.c.bf16 %v34, %v32
  %v287 = vpack.c.bf16 %v35, %v33
  %v288 = vpack.c.bf16 %v38, %v36
  %v289 = vpack.c.bf16 %v39, %v37
  %v290 = vpack.c.bf16 %v42, %v40
  %v291 = vpack.c.bf16 %v43, %v41
  %v292 = vpack.c.bf16 %v46, %v44
  %v293 = vpack.c.bf16 %v47, %v45
  %v294 = vpack.c.bf16 %v50, %v48
  %v295 = vpack.c.bf16 %v51, %v49
  %v296 = vpack.c.bf16 %v54, %v52
  %v297 = vpack.c.bf16 %v55, %v53
  %v298 = vpack.c.bf16 %v58, %v56
  %v299 = vpack.c.bf16 %v59, %v57
  %v300 = vpack.c.bf16 %v62, %v60
  %v301 = vpack.c.bf16 %v63, %v61
  %v302 = vpack.c.bf16 %v66, %v64
  %v303 = vpack.c.bf16 %v67, %v65
  %v304 = vpack.c.bf16 %v70, %v68
  %v305 = vpack.c.bf16 %v71, %v69
  %v306 = vpack.c.bf16 %v74, %v72
  %v307 = vpack.c.bf16 %v75, %v73
  %v308 = vpack.c.bf16 %v78, %v76
  %v309 = vpack.c.bf16 %v79, %v77
  %v310 = vpack.c.bf16 %v82, %v80
  %v311 = vpack.c.bf16 %v83, %v81
  %v312 = vpack.c.bf16 %v86, %v84
  %v313 = vpack.c.bf16 %v87, %v85
  %v314 = vpack.c.bf16 %v90, %v88
  %v315 = vpack.c.bf16 %v91, %v89
  %v316 = vpack.c.bf16 %v94, %v92
  %v317 = vpack.c.bf16 %v95, %v93
  %v318 = vpack.c.bf16 %v98, %v96
  %v319 = vpack.c.bf16 %v99, %v97
  %v320 = vpack.c.bf16 %v102, %v100
  %v321 = vpack.c.bf16 %v103, %v101
  %v322 = vpack.c.bf16 %v106, %v104
  %v323 = vpack.c.bf16 %v107, %v105
  %v324 = vpack.c.bf16 %v110, %v108
  %v325 = vpack.c.bf16 %v111, %v109
  %v326 = vpack.c.bf16 %v114, %v112
  %v327 = vpack.c.bf16 %v115, %v113
  %v328 = vpack.c.bf16 %v118, %v116
  %v329 = vpack.c.bf16 %v119, %v117
  %v330 = vpack.c.bf16 %v122, %v120
  %v331 = vpack.c.bf16 %v123, %v121
  %v332 = vpack.c.bf16 %v126, %v124
  %v333 = vpack.c.bf16 %v127, %v125
  %v334 = vpack.c.bf16 %v130, %v128
  %v335 = vpack.c.bf16 %v131, %v129
  %v336 = vpack.c.bf16 %v134, %v132
  %v337 = vpack.c.bf16 %v135, %v133
  %v338 = vpack.c.bf16 %v138, %v136
  %v339 = vpack.c.bf16 %v139, %v137
  %v340 = vpack.c.bf16 %v142, %v140
  %v341 = vpack.c.bf16 %v143, %v141
  %v342 = vpack.c.bf16 %v146, %v144
  %v343 = vpack.c.bf16 %v147, %v145
  %v344 = vpack.c.bf16 %v150, %v148
  %v345 = vpack.c.bf16 %v151, %v149
  %v346 = vpack.c.bf16 %v154, %v152
  %v347 = vpack.c.bf16 %v155, %v153
  %v348 = vpack.c.bf16 %v158, %v156
  %v349 = vpack.c.bf16 %v159, %v157
  %v350 = vpack.c.bf16 %v162, %v160
  %v351 = vpack.c.bf16 %v163, %v161
  %v352 = vpack.c.bf16 %v166, %v164
  %v353 = vpack.c.bf16 %v167, %v165
  %v354 = vpack.c.bf16 %v170, %v168
  %v355 = vpack.c.bf16 %v171, %v169
  %v356 = vpack.c.bf16 %v174, %v172
  %v357 = vpack.c.bf16 %v175, %v173
  %v358 = vpack.c.bf16 %v178, %v176
  %v359 = vpack.c.bf16 %v179, %v177
  %v360 = vpack.c.bf16 %v182, %v180
  %v361 = vpack.c.bf16 %v183, %v181
  %v362 = vpack.c.bf16 %v186, %v184
  %v363 = vpack.c.bf16 %v187, %v185
  %v364 = vpack.c.bf16 %v190, %v188
  %v365 = vpack.c.bf16 %v191, %v189
  %v366 = vpack.c.bf16 %v194, %v192
  %v367 = vpack.c.bf16 %v195, %v193
  %v368 = vpack.c.bf16 %v198, %v196
  %v369 = vpack.c.bf16 %v199, %v197
  %v370 = vpack.c.bf16 %v202, %v200
  %v371 = vpack.c.bf16 %v203, %v201
  %v372 = vpack.c.bf16 %v206, %v204
  %v373 = vpack.c.bf16 %v207, %v205
  %v374 = vpack.c.bf16 %v210, %v208
  %v375 = vpack.c.bf16 %v211, %v209
  %v376 = vpack.c.bf16 %v214, %v212
  %v377 = vpack.c.bf16 %v215, %v213
  %v378 = vpack.c.bf16 %v218, %v216
  %v379 = vpack.c.bf16 %v219, %v217
  %v380 = vpack.c.bf16 %v222, %v220
  %v381 = vpack.c.bf16 %v223, %v221
  %v382 = vpack.c.bf16 %v226, %v224
  %v383 = vpack.c.bf16 %v227, %v225
  %v384 = vpack.c.bf16 %v230, %v228
  %v385 = vpack.c.bf16 %v231, %v229
  %v386 = vpack.c.bf16 %v234, %v232
  %v387 = vpack.c.bf16 %v235, %v233
  %v388 = vpack.c.bf16 %v238, %v236
  %v389 = vpack.c.bf16 %v239, %v237
  %v390 = vpack.c.bf16 %v242, %v240
  %v391 = vpack.c.bf16 %v243, %v241
  %v392 = vpack.c.bf16 %v246, %v244
  %v393 = vpack.c.bf16 %v247, %v245
  %v394 = vpack.c.bf16 %v250, %v248
  %v395 = vpack.c.bf16 %v251, %v249
  %v396 = vpack.c.bf16 %v254, %v252
  %v397 = vpack.c.bf16 %v255, %v253
  %v398 = vpack.c.bf16 %v258, %v256
  %v399 = vpack.c.bf16 %v259, %v257
  %v400 = vpack.c.bf16 %v262, %v260
  %v401 = vpack.c.bf16 %v263, %v261
  %v402 = vpack.c.bf16 %v266, %v264
  %v403 = vpack.c.bf16 %v267, %v265
  %v404 = vpack.c.bf16 %v270, %v268
  %v405 = vpack.c.bf16 %v271, %v269
  %v406 = vpack.c.bf16 %v274, %v272
  %v407 = vpack.c.bf16 %v275, %v273
  %v408 = vld [vmem:[%s0] sm:$0xff]
  %v409 = vld [vmem:[%s0 + $0x8] sm:$0xff]
  %v410 = vld [vmem:[%s0 + $0x10] sm:$0xff]
  %v411 = vld [vmem:[%s0 + $0x18] sm:$0xff]
  %v412 = vld [vmem:[%s0 + $0x20] sm:$0xf]
  %v413 = vld [vmem:[%s0 + $0x24] sm:$0xff]
  %v414 = vld [vmem:[%s0 + $0x2c] sm:$0xff]
  %v415 = vld [vmem:[%s0 + $0x34] sm:$0xff]
  %v416 = vld [vmem:[%s0 + $0x3c] sm:$0xff]
  %v417 = vld [vmem:[%s0 + $0x44] sm:$0xf]
  %v418 = vld [vmem:[%s0 + $0x48] sm:$0xff]
  %v419 = vld [vmem:[%s0 + $0x50] sm:$0xff]
  %v420 = vld [vmem:[%s0 + $0x58] sm:$0xff]
  %v421 = vld [vmem:[%s0 + $0x60] sm:$0xff]
  %v422 = vld [vmem:[%s0 + $0x68] sm:$0xf]
  %v423 = vld [vmem:[%s0 + $0x6c] sm:$0xff]
  %v424 = vld [vmem:[%s0 + $0x74] sm:$0xff]
  %v425 = vld [vmem:[%s0 + $0x7c] sm:$0xff]
  %v426 = vld [vmem:[%s0 + $0x84] sm:$0xff]
  %v427 = vld [vmem:[%s0 + $0x8c] sm:$0xf]
  %v428 = vld [vmem:[%s0 + $0x90] sm:$0xff]
  %v429 = vld [vmem:[%s0 + $0x98] sm:$0xff]
  %v430 = vld [vmem:[%s0 + $0xa0] sm:$0xff]
  %v431 = vld [vmem:[%s0 + $0xa8] sm:$0xff]
  %v432 = vld [vmem:[%s0 + $0xb0] sm:$0xf]
  %v433 = vld [vmem:[%s0 + $0xb4] sm:$0xff]
  %v434 = vld [vmem:[%s0 + $0xbc] sm:$0xff]
  %v435 = vld [vmem:[%s0 + $0xc4] sm:$0xff]
  %v436 = vld [vmem:[%s0 + $0xcc] sm:$0xff]
  %v437 = vld [vmem:[%s0 + $0xd4] sm:$0xf]
  %v438 = vld [vmem:[%s0 + $0xd8] sm:$0xff]
  %v439 = vld [vmem:[%s0 + $0xe0] sm:$0xff]
  %v440 = vld [vmem:[%s0 + $0xe8] sm:$0xff]
  %v441 = vld [vmem:[%s0 + $0xf0] sm:$0xff]
  %v442 = vld [vmem:[%s0 + $0xf8] sm:$0xf]
  %v443 = vld [vmem:[%s0 + $0xfc] sm:$0xff]
  %v444 = vld [vmem:[%s0 + $0x104] sm:$0xff]
  %v445 = vld [vmem:[%s0 + $0x10c] sm:$0xff]
  %v446 = vld [vmem:[%s0 + $0x114] sm:$0xff]
  %v447 = vld [vmem:[%s0 + $0x11c] sm:$0xf]
  %v448 = vld [vmem:[%s0 + $0x120] sm:$0xff]
  %v449 = vld [vmem:[%s0 + $0x128] sm:$0xff]
  %v450 = vld [vmem:[%s0 + $0x130] sm:$0xff]
  %v451 = vld [vmem:[%s0 + $0x138] sm:$0xff]
  %v452 = vld [vmem:[%s0 + $0x140] sm:$0xf]
  %v453 = vld [vmem:[%s0 + $0x144] sm:$0xff]
  %v454 = vld [vmem:[%s0 + $0x14c] sm:$0xff]
  %v455 = vld [vmem:[%s0 + $0x154] sm:$0xff]
  %v456 = vld [vmem:[%s0 + $0x15c] sm:$0xff]
  %v457 = vld [vmem:[%s0 + $0x164] sm:$0xf]
  %v458 = vld [vmem:[%s0 + $0x168] sm:$0xff]
  %v459 = vld [vmem:[%s0 + $0x170] sm:$0xff]
  %v460 = vld [vmem:[%s0 + $0x178] sm:$0xff]
  %v461 = vld [vmem:[%s0 + $0x180] sm:$0xff]
  %v462 = vld [vmem:[%s0 + $0x188] sm:$0xf]
  %v463 = vld [vmem:[%s0 + $0x18c] sm:$0xff]
  %v464 = vld [vmem:[%s0 + $0x194] sm:$0xff]
  %v465 = vld [vmem:[%s0 + $0x19c] sm:$0xff]
  %v466 = vld [vmem:[%s0 + $0x1a4] sm:$0xff]
  %v467 = vld [vmem:[%s0 + $0x1ac] sm:$0xf]
  %v468 = vld [vmem:[%s0 + $0x1b0] sm:$0xff]
  %v469 = vld [vmem:[%s0 + $0x1b8] sm:$0xff]
  %v470 = vld [vmem:[%s0 + $0x1c0] sm:$0xff]
  %v471 = vld [vmem:[%s0 + $0x1c8] sm:$0xff]
  %v472 = vld [vmem:[%s0 + $0x1d0] sm:$0xf]
  %v473 = vld [vmem:[%s0 + $0x1d4] sm:$0xff]
  %v474 = vld [vmem:[%s0 + $0x1dc] sm:$0xff]
  %v475 = vld [vmem:[%s0 + $0x1e4] sm:$0xff]
  %v476 = vld [vmem:[%s0 + $0x1ec] sm:$0xff]
  %v477 = vld [vmem:[%s0 + $0x1f4] sm:$0xf]
  %v478 = vld [vmem:[%s0 + $0x1f8] sm:$0xff]
  %v479 = vld [vmem:[%s0 + $0x200] sm:$0xff]
  %v480 = vld [vmem:[%s0 + $0x208] sm:$0xff]
  %v481 = vld [vmem:[%s0 + $0x210] sm:$0xff]
  %v482 = vld [vmem:[%s0 + $0x218] sm:$0xf]
  %v483 = vld [vmem:[%s0 + $0x21c] sm:$0xff]
  %v484 = vld [vmem:[%s0 + $0x224] sm:$0xff]
  %v485 = vld [vmem:[%s0 + $0x22c] sm:$0xff]
  %v486 = vld [vmem:[%s0 + $0x234] sm:$0xff]
  %v487 = vld [vmem:[%s0 + $0x23c] sm:$0xf]
  %v488 = vld [vmem:[%s0 + $0x240] sm:$0xff]
  %v489 = vld [vmem:[%s0 + $0x248] sm:$0xff]
  %v490 = vld [vmem:[%s0 + $0x250] sm:$0xff]
  %v491 = vld [vmem:[%s0 + $0x258] sm:$0xff]
  %v492 = vld [vmem:[%s0 + $0x260] sm:$0xf]
  %v493 = vld [vmem:[%s0 + $0x264] sm:$0xff]
  %v494 = vld [vmem:[%s0 + $0x26c] sm:$0xff]
  %v495 = vld [vmem:[%s0 + $0x274] sm:$0xff]
  %v496 = vld [vmem:[%s0 + $0x27c] sm:$0xff]
  %v497 = vld [vmem:[%s0 + $0x284] sm:$0xf]
  %v498 = vld [vmem:[%s0 + $0x288] sm:$0xff]
  %v499 = vld [vmem:[%s0 + $0x290] sm:$0xff]
  %v500 = vld [vmem:[%s0 + $0x298] sm:$0xff]
  %v501 = vld [vmem:[%s0 + $0x2a0] sm:$0xff]
  %v502 = vld [vmem:[%s0 + $0x2a8] sm:$0xf]
  %v503 = vld [vmem:[%s0 + $0x2ac] sm:$0xff]
  %v504 = vld [vmem:[%s0 + $0x2b4] sm:$0xff]
  %v505 = vld [vmem:[%s0 + $0x2bc] sm:$0xff]
  %v506 = vld [vmem:[%s0 + $0x2c4] sm:$0xff]
  %v507 = vld [vmem:[%s0 + $0x2cc] sm:$0xf]
  %v508 = vld [vmem:[%s0 + $0x2d0] sm:$0xff]
  %v509 = vld [vmem:[%s0 + $0x2d8] sm:$0xff]
  %v510 = vld [vmem:[%s0 + $0x2e0] sm:$0xff]
  %v511 = vld [vmem:[%s0 + $0x2e8] sm:$0xff]
  %v512 = vld [vmem:[%s0 + $0x2f0] sm:$0xf]
  %v513 = vld [vmem:[%s0 + $0x2f4] sm:$0xff]
  %v514 = vld [vmem:[%s0 + $0x2fc] sm:$0xff]
  %v515 = vld [vmem:[%s0 + $0x304] sm:$0xff]
  %v516 = vld [vmem:[%s0 + $0x30c] sm:$0xff]
  %v517 = vld [vmem:[%s0 + $0x314] sm:$0xf]
  %v628 = vunpack.c.l.b16 %v408
  %v629 = vunpack.c.h.b16 %v408
  %v630 = vunpack.c.l.b16 %v409
  %v631 = vunpack.c.h.b16 %v409
  %v632 = vunpack.c.l.b16 %v410
  %v633 = vunpack.c.h.b16 %v410
  %v634 = vunpack.c.l.b16 %v411
  %v635 = vunpack.c.h.b16 %v411
  %v636 = vunpack.c.l.b16 %v412
  %v637 = vunpack.c.l.b16 %v413
  %v638 = vunpack.c.h.b16 %v413
  %v639 = vunpack.c.l.b16 %v414
  %v640 = vunpack.c.h.b16 %v414
  %v641 = vunpack.c.l.b16 %v415
  %v642 = vunpack.c.h.b16 %v415
  %v643 = vunpack.c.l.b16 %v416
  %v644 = vunpack.c.h.b16 %v416
  %v645 = vunpack.c.l.b16 %v417
  %v646 = vunpack.c.l.b16 %v418
  %v647 = vunpack.c.h.b16 %v418
  %v648 = vunpack.c.l.b16 %v419
  %v649 = vunpack.c.h.b16 %v419
  %v650 = vunpack.c.l.b16 %v420
  %v651 = vunpack.c.h.b16 %v420
  %v652 = vunpack.c.l.b16 %v421
  %v653 = vunpack.c.h.b16 %v421
  %v654 = vunpack.c.l.b16 %v422
  %v655 = vunpack.c.l.b16 %v423
  %v656 = vunpack.c.h.b16 %v423
  %v657 = vunpack.c.l.b16 %v424
  %v658 = vunpack.c.h.b16 %v424
  %v659 = vunpack.c.l.b16 %v425
  %v660 = vunpack.c.h.b16 %v425
  %v661 = vunpack.c.l.b16 %v426
  %v662 = vunpack.c.h.b16 %v426
  %v663 = vunpack.c.l.b16 %v427
  %v664 = vunpack.c.l.b16 %v428
  %v665 = vunpack.c.h.b16 %v428
  %v666 = vunpack.c.l.b16 %v429
  %v667 = vunpack.c.h.b16 %v429
  %v668 = vunpack.c.l.b16 %v430
  %v669 = vunpack.c.h.b16 %v430
  %v670 = vunpack.c.l.b16 %v431
  %v671 = vunpack.c.h.b16 %v431
  %v672 = vunpack.c.l.b16 %v432
  %v673 = vunpack.c.l.b16 %v433
  %v674 = vunpack.c.h.b16 %v433
  %v675 = vunpack.c.l.b16 %v434
  %v676 = vunpack.c.h.b16 %v434
  %v677 = vunpack.c.l.b16 %v435
  %v678 = vunpack.c.h.b16 %v435
  %v679 = vunpack.c.l.b16 %v436
  %v680 = vunpack.c.h.b16 %v436
  %v681 = vunpack.c.l.b16 %v437
  %v682 = vunpack.c.l.b16 %v438
  %v683 = vunpack.c.h.b16 %v438
  %v684 = vunpack.c.l.b16 %v439
  %v685 = vunpack.c.h.b16 %v439
  %v686 = vunpack.c.l.b16 %v440
  %v687 = vunpack.c.h.b16 %v440
  %v688 = vunpack.c.l.b16 %v441
  %v689 = vunpack.c.h.b16 %v441
  %v690 = vunpack.c.l.b16 %v442
  %v691 = vunpack.c.l.b16 %v443
  %v692 = vunpack.c.h.b16 %v443
  %v693 = vunpack.c.l.b16 %v444
  %v694 = vunpack.c.h.b16 %v444
  %v695 = vunpack.c.l.b16 %v445
  %v696 = vunpack.c.h.b16 %v445
  %v697 = vunpack.c.l.b16 %v446
  %v698 = vunpack.c.h.b16 %v446
  %v699 = vunpack.c.l.b16 %v447
  %v700 = vunpack.c.l.b16 %v448
  %v701 = vunpack.c.h.b16 %v448
  %v702 = vunpack.c.l.b16 %v449
  %v703 = vunpack.c.h.b16 %v449
  %v704 = vunpack.c.l.b16 %v450
  %v705 = vunpack.c.h.b16 %v450
  %v706 = vunpack.c.l.b16 %v451
  %v707 = vunpack.c.h.b16 %v451
  %v708 = vunpack.c.l.b16 %v452
  %v709 = vunpack.c.l.b16 %v453
  %v710 = vunpack.c.h.b16 %v453
  %v711 = vunpack.c.l.b16 %v454
  %v712 = vunpack.c.h.b16 %v454
  %v713 = vunpack.c.l.b16 %v455
  %v714 = vunpack.c.h.b16 %v455
  %v715 = vunpack.c.l.b16 %v456
  %v716 = vunpack.c.h.b16 %v456
  %v717 = vunpack.c.l.b16 %v457
  %v718 = vunpack.c.l.b16 %v458
  %v719 = vunpack.c.h.b16 %v458
  %v720 = vunpack.c.l.b16 %v459
  %v721 = vunpack.c.h.b16 %v459
  %v722 = vunpack.c.l.b16 %v460
  %v723 = vunpack.c.h.b16 %v460
  %v724 = vunpack.c.l.b16 %v461
  %v725 = vunpack.c.h.b16 %v461
  %v726 = vunpack.c.l.b16 %v462
  %v727 = vunpack.c.l.b16 %v463
  %v728 = vunpack.c.h.b16 %v463
  %v729 = vunpack.c.l.b16 %v464
  %v730 = vunpack.c.h.b16 %v464
  %v731 = vunpack.c.l.b16 %v465
  %v732 = vunpack.c.h.b16 %v465
  %v733 = vunpack.c.l.b16 %v466
  %v734 = vunpack.c.h.b16 %v466
  %v735 = vunpack.c.l.b16 %v467
  %v736 = vunpack.c.l.b16 %v468
  %v737 = vunpack.c.h.b16 %v468
  %v738 = vunpack.c.l.b16 %v469
  %v739 = vunpack.c.h.b16 %v469
  %v740 = vunpack.c.l.b16 %v470
  %v741 = vunpack.c.h.b16 %v470
  %v742 = vunpack.c.l.b16 %v471
  %v743 = vunpack.c.h.b16 %v471
  %v744 = vunpack.c.l.b16 %v472
  %v745 = vunpack.c.l.b16 %v473
  %v746 = vunpack.c.h.b16 %v473
  %v747 = vunpack.c.l.b16 %v474
  %v748 = vunpack.c.h.b16 %v474
  %v749 = vunpack.c.l.b16 %v475
  %v750 = vunpack.c.h.b16 %v475
  %v751 = vunpack.c.l.b16 %v476
  %v752 = vunpack.c.h.b16 %v476
  %v753 = vunpack.c.l.b16 %v477
  %v754 = vunpack.c.l.b16 %v478
  %v755 = vunpack.c.h.b16 %v478
  %v756 = vunpack.c.l.b16 %v479
  %v757 = vunpack.c.h.b16 %v479
  %v758 = vunpack.c.l.b16 %v480
  %v759 = vunpack.c.h.b16 %v480
  %v760 = vunpack.c.l.b16 %v481
  %v761 = vunpack.c.h.b16 %v481
  %v762 = vunpack.c.l.b16 %v482
  %v763 = vunpack.c.l.b16 %v483
  %v764 = vunpack.c.h.b16 %v483
  %v765 = vunpack.c.l.b16 %v484
  %v766 = vunpack.c.h.b16 %v484
  %v767 = vunpack.c.l.b16 %v485
  %v768 = vunpack.c.h.b16 %v485
  %v769 = vunpack.c.l.b16 %v486
  %v770 = vunpack.c.h.b16 %v486
  %v771 = vunpack.c.l.b16 %v487
  %v772 = vunpack.c.l.b16 %v488
  %v773 = vunpack.c.h.b16 %v488
  %v774 = vunpack.c.l.b16 %v489
  %v775 = vunpack.c.h.b16 %v489
  %v776 = vunpack.c.l.b16 %v490
  %v777 = vunpack.c.h.b16 %v490
  %v778 = vunpack.c.l.b16 %v491
  %v779 = vunpack.c.h.b16 %v491
  %v780 = vunpack.c.l.b16 %v492
  %v781 = vunpack.c.l.b16 %v493
  %v782 = vunpack.c.h.b16 %v493
  %v783 = vunpack.c.l.b16 %v494
  %v784 = vunpack.c.h.b16 %v494
  %v785 = vunpack.c.l.b16 %v495
  %v786 = vunpack.c.h.b16 %v495
  %v787 = vunpack.c.l.b16 %v496
  %v788 = vunpack.c.h.b16 %v496
  %v789 = vunpack.c.l.b16 %v497
  %v790 = vunpack.c.l.b16 %v498
  %v791 = vunpack.c.h.b16 %v498
  %v792 = vunpack.c.l.b16 %v499
  %v793 = vunpack.c.h.b16 %v499
  %v794 = vunpack.c.l.b16 %v500
  %v795 = vunpack.c.h.b16 %v500
  %v796 = vunpack.c.l.b16 %v501
  %v797 = vunpack.c.h.b16 %v501
  %v798 = vunpack.c.l.b16 %v502
  %v799 = vunpack.c.l.b16 %v503
  %v800 = vunpack.c.h.b16 %v503
  %v801 = vunpack.c.l.b16 %v504
  %v802 = vunpack.c.h.b16 %v504
  %v803 = vunpack.c.l.b16 %v505
  %v804 = vunpack.c.h.b16 %v505
  %v805 = vunpack.c.l.b16 %v506
  %v806 = vunpack.c.h.b16 %v506
  %v807 = vunpack.c.l.b16 %v507
  %v808 = vunpack.c.l.b16 %v508
  %v809 = vunpack.c.h.b16 %v508
  %v810 = vunpack.c.l.b16 %v509
  %v811 = vunpack.c.h.b16 %v509
  %v812 = vunpack.c.l.b16 %v510
  %v813 = vunpack.c.h.b16 %v510
  %v814 = vunpack.c.l.b16 %v511
  %v815 = vunpack.c.h.b16 %v511
  %v816 = vunpack.c.l.b16 %v512
  %v817 = vunpack.c.l.b16 %v513
  %v818 = vunpack.c.h.b16 %v513
  %v819 = vunpack.c.l.b16 %v514
  %v820 = vunpack.c.h.b16 %v514
  %v821 = vunpack.c.l.b16 %v515
  %v822 = vunpack.c.h.b16 %v515
  %v823 = vunpack.c.l.b16 %v516
  %v824 = vunpack.c.h.b16 %v516
  %v825 = vunpack.c.l.b16 %v517
  %v826 = vpack.c.b16 %v637, %v628
  %v827 = vpack.c.b16 %v638, %v629
  %v828 = vpack.c.b16 %v639, %v630
  %v829 = vpack.c.b16 %v640, %v631
  %v830 = vpack.c.b16 %v641, %v632
  %v831 = vpack.c.b16 %v642, %v633
  %v832 = vpack.c.b16 %v643, %v634
  %v833 = vpack.c.b16 %v644, %v635
  %v834 = vpack.c.b16 %v645, %v636
  %v835 = vpack.c.b16 %v655, %v646
  %v836 = vpack.c.b16 %v656, %v647
  %v837 = vpack.c.b16 %v657, %v648
  %v838 = vpack.c.b16 %v658, %v649
  %v839 = vpack.c.b16 %v659, %v650
  %v840 = vpack.c.b16 %v660, %v651
  %v841 = vpack.c.b16 %v661, %v652
  %v842 = vpack.c.b16 %v662, %v653
  %v843 = vpack.c.b16 %v663, %v654
  %v844 = vpack.c.b16 %v673, %v664
  %v845 = vpack.c.b16 %v674, %v665
  %v846 = vpack.c.b16 %v675, %v666
  %v847 = vpack.c.b16 %v676, %v667
  %v848 = vpack.c.b16 %v677, %v668
  %v849 = vpack.c.b16 %v678, %v669
  %v850 = vpack.c.b16 %v679, %v670
  %v851 = vpack.c.b16 %v680, %v671
  %v852 = vpack.c.b16 %v681, %v672
  %v853 = vpack.c.b16 %v691, %v682
  %v854 = vpack.c.b16 %v692, %v683
  %v855 = vpack.c.b16 %v693, %v684
  %v856 = vpack.c.b16 %v694, %v685
  %v857 = vpack.c.b16 %v695, %v686
  %v858 = vpack.c.b16 %v696, %v687
  %v859 = vpack.c.b16 %v697, %v688
  %v860 = vpack.c.b16 %v698, %v689
  %v861 = vpack.c.b16 %v699, %v690
  %v862 = vpack.c.b16 %v709, %v700
  %v863 = vpack.c.b16 %v710, %v701
  %v864 = vpack.c.b16 %v711, %v702
  %v865 = vpack.c.b16 %v712, %v703
  %v866 = vpack.c.b16 %v713, %v704
  %v867 = vpack.c.b16 %v714, %v705
  %v868 = vpack.c.b16 %v715, %v706
  %v869 = vpack.c.b16 %v716, %v707
  %v870 = vpack.c.b16 %v717, %v708
  %v871 = vpack.c.b16 %v727, %v718
  %v872 = vpack.c.b16 %v728, %v719
  %v873 = vpack.c.b16 %v729, %v720
  %v874 = vpack.c.b16 %v730, %v721
  %v875 = vpack.c.b16 %v731, %v722
  %v876 = vpack.c.b16 %v732, %v723
  %v877 = vpack.c.b16 %v733, %v724
  %v878 = vpack.c.b16 %v734, %v725
  %v879 = vpack.c.b16 %v735, %v726
  %v880 = vpack.c.b16 %v745, %v736
  %v881 = vpack.c.b16 %v746, %v737
  %v882 = vpack.c.b16 %v747, %v738
  %v883 = vpack.c.b16 %v748, %v739
  %v884 = vpack.c.b16 %v749, %v740
  %v885 = vpack.c.b16 %v750, %v741
  %v886 = vpack.c.b16 %v751, %v742
  %v887 = vpack.c.b16 %v752, %v743
  %v888 = vpack.c.b16 %v753, %v744
  %v889 = vpack.c.b16 %v763, %v754
  %v890 = vpack.c.b16 %v764, %v755
  %v891 = vpack.c.b16 %v765, %v756
  %v892 = vpack.c.b16 %v766, %v757
  %v893 = vpack.c.b16 %v767, %v758
  %v894 = vpack.c.b16 %v768, %v759
  %v895 = vpack.c.b16 %v769, %v760
  %v896 = vpack.c.b16 %v770, %v761
  %v897 = vpack.c.b16 %v771, %v762
  %v898 = vpack.c.b16 %v781, %v772
  %v899 = vpack.c.b16 %v782, %v773
  %v900 = vpack.c.b16 %v783, %v774
  %v901 = vpack.c.b16 %v784, %v775
  %v902 = vpack.c.b16 %v785, %v776
  %v903 = vpack.c.b16 %v786, %v777
  %v904 = vpack.c.b16 %v787, %v778
  %v905 = vpack.c.b16 %v788, %v779
  %v906 = vpack.c.b16 %v789, %v780
  %v907 = vpack.c.b16 %v799, %v790
  %v908 = vpack.c.b16 %v800, %v791
  %v909 = vpack.c.b16 %v801, %v792
  %v910 = vpack.c.b16 %v802, %v793
  %v911 = vpack.c.b16 %v803, %v794
  %v912 = vpack.c.b16 %v804, %v795
  %v913 = vpack.c.b16 %v805, %v796
  %v914 = vpack.c.b16 %v806, %v797
  %v915 = vpack.c.b16 %v807, %v798
  %v916 = vpack.c.b16 %v817, %v808
  %v917 = vpack.c.b16 %v818, %v809
  %v918 = vpack.c.b16 %v819, %v810
  %v919 = vpack.c.b16 %v820, %v811
  %v920 = vpack.c.b16 %v821, %v812
  %v921 = vpack.c.b16 %v822, %v813
  %v922 = vpack.c.b16 %v823, %v814
  %v923 = vpack.c.b16 %v824, %v815
  %v924 = vpack.c.b16 %v825, %v816
  %vm1013 = vcmask 261120
  %v1015 = vsel %vm1013, %v834, 0
  %v1018 = vsel %vm1013, %v843, 0
  %v1021 = vsel %vm1013, %v852, 0
  %v1024 = vsel %vm1013, %v861, 0
  %v1027 = vsel %vm1013, %v870, 0
  %v1030 = vsel %vm1013, %v879, 0
  %v1033 = vsel %vm1013, %v888, 0
  %v1036 = vsel %vm1013, %v897, 0
  %v1039 = vsel %vm1013, %v906, 0
  %v1042 = vsel %vm1013, %v915, 0
  %v1045 = vsel %vm1013, %v924, 0
  %1047 = vmatpush.bf16.msra.mxu0 %v290
  %1048 = vmatpush.bf16.msra.mxu0 %v288
  %1049 = vmatpush.bf16.msra.mxu0 %v286
  %1050 = vmatpush.bf16.msra.mxu0 %v284
  %1051 = vmatpush.bf16.msra.mxu0 %v282
  %1052 = vmatpush.bf16.msra.mxu0 %v280
  %1053 = vmatpush.bf16.msra.mxu0 %v278
  %1054 = vmatpush.bf16.msra.mxu0 %v276
  %1055 = vmatmul.bf16.gmra.mxu0 %v826
  %v1056 = vpop.f32.mrf.mxu0
  %v1057 = vadd.f32 0.0, %v1056
  %v1058 = vpop.f32.mrf.mxu0
  %v1059 = vadd.f32 0.0, %v1058
  %1060 = vmatmul.bf16.gmra.mxu0 %v835
  %v1061 = vpop.f32.mrf.mxu0
  %v1062 = vadd.f32 0.0, %v1061
  %v1063 = vpop.f32.mrf.mxu0
  %v1064 = vadd.f32 0.0, %v1063
  %1065 = vmatmul.bf16.gmra.mxu0 %v844
  %v1066 = vpop.f32.mrf.mxu0
  %v1067 = vadd.f32 0.0, %v1066
  %v1068 = vpop.f32.mrf.mxu0
  %v1069 = vadd.f32 0.0, %v1068
  %1070 = vmatmul.bf16.gmra.mxu0 %v853
  %v1071 = vpop.f32.mrf.mxu0
  %v1072 = vadd.f32 0.0, %v1071
  %v1073 = vpop.f32.mrf.mxu0
  %v1074 = vadd.f32 0.0, %v1073
  %1075 = vmatmul.bf16.gmra.mxu0 %v862
  %v1076 = vpop.f32.mrf.mxu0
  %v1077 = vadd.f32 0.0, %v1076
  %v1078 = vpop.f32.mrf.mxu0
  %v1079 = vadd.f32 0.0, %v1078
  %1080 = vmatmul.bf16.gmra.mxu0 %v871
  %v1081 = vpop.f32.mrf.mxu0
  %v1082 = vadd.f32 0.0, %v1081
  %v1083 = vpop.f32.mrf.mxu0
  %v1084 = vadd.f32 0.0, %v1083
  %1085 = vmatmul.bf16.gmra.mxu0 %v880
  %v1086 = vpop.f32.mrf.mxu0
  %v1087 = vadd.f32 0.0, %v1086
  %v1088 = vpop.f32.mrf.mxu0
  %v1089 = vadd.f32 0.0, %v1088
  %1090 = vmatmul.bf16.gmra.mxu0 %v889
  %v1091 = vpop.f32.mrf.mxu0
  %v1092 = vadd.f32 0.0, %v1091
  %v1093 = vpop.f32.mrf.mxu0
  %v1094 = vadd.f32 0.0, %v1093
  %1095 = vmatmul.bf16.gmra.mxu0 %v898
  %v1096 = vpop.f32.mrf.mxu0
  %v1097 = vadd.f32 0.0, %v1096
  %v1098 = vpop.f32.mrf.mxu0
  %v1099 = vadd.f32 0.0, %v1098
  %1100 = vmatmul.bf16.gmra.mxu0 %v907
  %v1101 = vpop.f32.mrf.mxu0
  %v1102 = vadd.f32 0.0, %v1101
  %v1103 = vpop.f32.mrf.mxu0
  %v1104 = vadd.f32 0.0, %v1103
  %1105 = vmatmul.bf16.gmra.mxu0 %v916
  %v1106 = vpop.f32.mrf.mxu0
  %v1107 = vadd.f32 0.0, %v1106
  %v1108 = vpop.f32.mrf.mxu0
  %v1109 = vadd.f32 0.0, %v1108
  %1110 = vdwg.mxu0
  %1111 = vmatpush.bf16.msra.mxu0 %v306
  %1112 = vmatpush.bf16.msra.mxu0 %v304
  %1113 = vmatpush.bf16.msra.mxu0 %v302
  %1114 = vmatpush.bf16.msra.mxu0 %v300
  %1115 = vmatpush.bf16.msra.mxu0 %v298
  %1116 = vmatpush.bf16.msra.mxu0 %v296
  %1117 = vmatpush.bf16.msra.mxu0 %v294
  %1118 = vmatpush.bf16.msra.mxu0 %v292
  %1119 = vmatmul.bf16.gmra.mxu0 %v827
  %v1120 = vpop.f32.mrf.mxu0
  %v1121 = vadd.f32 %v1057, %v1120
  %v1122 = vpop.f32.mrf.mxu0
  %v1123 = vadd.f32 %v1059, %v1122
  %1124 = vmatmul.bf16.gmra.mxu0 %v836
  %v1125 = vpop.f32.mrf.mxu0
  %v1126 = vadd.f32 %v1062, %v1125
  %v1127 = vpop.f32.mrf.mxu0
  %v1128 = vadd.f32 %v1064, %v1127
  %1129 = vmatmul.bf16.gmra.mxu0 %v845
  %v1130 = vpop.f32.mrf.mxu0
  %v1131 = vadd.f32 %v1067, %v1130
  %v1132 = vpop.f32.mrf.mxu0
  %v1133 = vadd.f32 %v1069, %v1132
  %1134 = vmatmul.bf16.gmra.mxu0 %v854
  %v1135 = vpop.f32.mrf.mxu0
  %v1136 = vadd.f32 %v1072, %v1135
  %v1137 = vpop.f32.mrf.mxu0
  %v1138 = vadd.f32 %v1074, %v1137
  %1139 = vmatmul.bf16.gmra.mxu0 %v863
  %v1140 = vpop.f32.mrf.mxu0
  %v1141 = vadd.f32 %v1077, %v1140
  %v1142 = vpop.f32.mrf.mxu0
  %v1143 = vadd.f32 %v1079, %v1142
  %1144 = vmatmul.bf16.gmra.mxu0 %v872
  %v1145 = vpop.f32.mrf.mxu0
  %v1146 = vadd.f32 %v1082, %v1145
  %v1147 = vpop.f32.mrf.mxu0
  %v1148 = vadd.f32 %v1084, %v1147
  %1149 = vmatmul.bf16.gmra.mxu0 %v881
  %v1150 = vpop.f32.mrf.mxu0
  %v1151 = vadd.f32 %v1087, %v1150
  %v1152 = vpop.f32.mrf.mxu0
  %v1153 = vadd.f32 %v1089, %v1152
  %1154 = vmatmul.bf16.gmra.mxu0 %v890
  %v1155 = vpop.f32.mrf.mxu0
  %v1156 = vadd.f32 %v1092, %v1155
  %v1157 = vpop.f32.mrf.mxu0
  %v1158 = vadd.f32 %v1094, %v1157
  %1159 = vmatmul.bf16.gmra.mxu0 %v899
  %v1160 = vpop.f32.mrf.mxu0
  %v1161 = vadd.f32 %v1097, %v1160
  %v1162 = vpop.f32.mrf.mxu0
  %v1163 = vadd.f32 %v1099, %v1162
  %1164 = vmatmul.bf16.gmra.mxu0 %v908
  %v1165 = vpop.f32.mrf.mxu0
  %v1166 = vadd.f32 %v1102, %v1165
  %v1167 = vpop.f32.mrf.mxu0
  %v1168 = vadd.f32 %v1104, %v1167
  %1169 = vmatmul.bf16.gmra.mxu0 %v917
  %v1170 = vpop.f32.mrf.mxu0
  %v1171 = vadd.f32 %v1107, %v1170
  %v1172 = vpop.f32.mrf.mxu0
  %v1173 = vadd.f32 %v1109, %v1172
  %1174 = vdwg.mxu0
  %1175 = vmatpush.bf16.msra.mxu0 %v322
  %1176 = vmatpush.bf16.msra.mxu0 %v320
  %1177 = vmatpush.bf16.msra.mxu0 %v318
  %1178 = vmatpush.bf16.msra.mxu0 %v316
  %1179 = vmatpush.bf16.msra.mxu0 %v314
  %1180 = vmatpush.bf16.msra.mxu0 %v312
  %1181 = vmatpush.bf16.msra.mxu0 %v310
  %1182 = vmatpush.bf16.msra.mxu0 %v308
  %1183 = vmatmul.bf16.gmra.mxu0 %v828
  %v1184 = vpop.f32.mrf.mxu0
  %v1185 = vadd.f32 %v1121, %v1184
  %v1186 = vpop.f32.mrf.mxu0
  %v1187 = vadd.f32 %v1123, %v1186
  %1188 = vmatmul.bf16.gmra.mxu0 %v837
  %v1189 = vpop.f32.mrf.mxu0
  %v1190 = vadd.f32 %v1126, %v1189
  %v1191 = vpop.f32.mrf.mxu0
  %v1192 = vadd.f32 %v1128, %v1191
  %1193 = vmatmul.bf16.gmra.mxu0 %v846
  %v1194 = vpop.f32.mrf.mxu0
  %v1195 = vadd.f32 %v1131, %v1194
  %v1196 = vpop.f32.mrf.mxu0
  %v1197 = vadd.f32 %v1133, %v1196
  %1198 = vmatmul.bf16.gmra.mxu0 %v855
  %v1199 = vpop.f32.mrf.mxu0
  %v1200 = vadd.f32 %v1136, %v1199
  %v1201 = vpop.f32.mrf.mxu0
  %v1202 = vadd.f32 %v1138, %v1201
  %1203 = vmatmul.bf16.gmra.mxu0 %v864
  %v1204 = vpop.f32.mrf.mxu0
  %v1205 = vadd.f32 %v1141, %v1204
  %v1206 = vpop.f32.mrf.mxu0
  %v1207 = vadd.f32 %v1143, %v1206
  %1208 = vmatmul.bf16.gmra.mxu0 %v873
  %v1209 = vpop.f32.mrf.mxu0
  %v1210 = vadd.f32 %v1146, %v1209
  %v1211 = vpop.f32.mrf.mxu0
  %v1212 = vadd.f32 %v1148, %v1211
  %1213 = vmatmul.bf16.gmra.mxu0 %v882
  %v1214 = vpop.f32.mrf.mxu0
  %v1215 = vadd.f32 %v1151, %v1214
  %v1216 = vpop.f32.mrf.mxu0
  %v1217 = vadd.f32 %v1153, %v1216
  %1218 = vmatmul.bf16.gmra.mxu0 %v891
  %v1219 = vpop.f32.mrf.mxu0
  %v1220 = vadd.f32 %v1156, %v1219
  %v1221 = vpop.f32.mrf.mxu0
  %v1222 = vadd.f32 %v1158, %v1221
  %1223 = vmatmul.bf16.gmra.mxu0 %v900
  %v1224 = vpop.f32.mrf.mxu0
  %v1225 = vadd.f32 %v1161, %v1224
  %v1226 = vpop.f32.mrf.mxu0
  %v1227 = vadd.f32 %v1163, %v1226
  %1228 = vmatmul.bf16.gmra.mxu0 %v909
  %v1229 = vpop.f32.mrf.mxu0
  %v1230 = vadd.f32 %v1166, %v1229
  %v1231 = vpop.f32.mrf.mxu0
  %v1232 = vadd.f32 %v1168, %v1231
  %1233 = vmatmul.bf16.gmra.mxu0 %v918
  %v1234 = vpop.f32.mrf.mxu0
  %v1235 = vadd.f32 %v1171, %v1234
  %v1236 = vpop.f32.mrf.mxu0
  %v1237 = vadd.f32 %v1173, %v1236
  %1238 = vdwg.mxu0
  %1239 = vmatpush.bf16.msra.mxu0 %v338
  %1240 = vmatpush.bf16.msra.mxu0 %v336
  %1241 = vmatpush.bf16.msra.mxu0 %v334
  %1242 = vmatpush.bf16.msra.mxu0 %v332
  %1243 = vmatpush.bf16.msra.mxu0 %v330
  %1244 = vmatpush.bf16.msra.mxu0 %v328
  %1245 = vmatpush.bf16.msra.mxu0 %v326
  %1246 = vmatpush.bf16.msra.mxu0 %v324
  %1247 = vmatmul.bf16.gmra.mxu0 %v829
  %v1248 = vpop.f32.mrf.mxu0
  %v1249 = vadd.f32 %v1185, %v1248
  %v1250 = vpop.f32.mrf.mxu0
  %v1251 = vadd.f32 %v1187, %v1250
  %1252 = vmatmul.bf16.gmra.mxu0 %v838
  %v1253 = vpop.f32.mrf.mxu0
  %v1254 = vadd.f32 %v1190, %v1253
  %v1255 = vpop.f32.mrf.mxu0
  %v1256 = vadd.f32 %v1192, %v1255
  %1257 = vmatmul.bf16.gmra.mxu0 %v847
  %v1258 = vpop.f32.mrf.mxu0
  %v1259 = vadd.f32 %v1195, %v1258
  %v1260 = vpop.f32.mrf.mxu0
  %v1261 = vadd.f32 %v1197, %v1260
  %1262 = vmatmul.bf16.gmra.mxu0 %v856
  %v1263 = vpop.f32.mrf.mxu0
  %v1264 = vadd.f32 %v1200, %v1263
  %v1265 = vpop.f32.mrf.mxu0
  %v1266 = vadd.f32 %v1202, %v1265
  %1267 = vmatmul.bf16.gmra.mxu0 %v865
  %v1268 = vpop.f32.mrf.mxu0
  %v1269 = vadd.f32 %v1205, %v1268
  %v1270 = vpop.f32.mrf.mxu0
  %v1271 = vadd.f32 %v1207, %v1270
  %1272 = vmatmul.bf16.gmra.mxu0 %v874
  %v1273 = vpop.f32.mrf.mxu0
  %v1274 = vadd.f32 %v1210, %v1273
  %v1275 = vpop.f32.mrf.mxu0
  %v1276 = vadd.f32 %v1212, %v1275
  %1277 = vmatmul.bf16.gmra.mxu0 %v883
  %v1278 = vpop.f32.mrf.mxu0
  %v1279 = vadd.f32 %v1215, %v1278
  %v1280 = vpop.f32.mrf.mxu0
  %v1281 = vadd.f32 %v1217, %v1280
  %1282 = vmatmul.bf16.gmra.mxu0 %v892
  %v1283 = vpop.f32.mrf.mxu0
  %v1284 = vadd.f32 %v1220, %v1283
  %v1285 = vpop.f32.mrf.mxu0
  %v1286 = vadd.f32 %v1222, %v1285
  %1287 = vmatmul.bf16.gmra.mxu0 %v901
  %v1288 = vpop.f32.mrf.mxu0
  %v1289 = vadd.f32 %v1225, %v1288
  %v1290 = vpop.f32.mrf.mxu0
  %v1291 = vadd.f32 %v1227, %v1290
  %1292 = vmatmul.bf16.gmra.mxu0 %v910
  %v1293 = vpop.f32.mrf.mxu0
  %v1294 = vadd.f32 %v1230, %v1293
  %v1295 = vpop.f32.mrf.mxu0
  %v1296 = vadd.f32 %v1232, %v1295
  %1297 = vmatmul.bf16.gmra.mxu0 %v919
  %v1298 = vpop.f32.mrf.mxu0
  %v1299 = vadd.f32 %v1235, %v1298
  %v1300 = vpop.f32.mrf.mxu0
  %v1301 = vadd.f32 %v1237, %v1300
  %1302 = vdwg.mxu0
  %1303 = vmatpush.bf16.msra.mxu0 %v354
  %1304 = vmatpush.bf16.msra.mxu0 %v352
  %1305 = vmatpush.bf16.msra.mxu0 %v350
  %1306 = vmatpush.bf16.msra.mxu0 %v348
  %1307 = vmatpush.bf16.msra.mxu0 %v346
  %1308 = vmatpush.bf16.msra.mxu0 %v344
  %1309 = vmatpush.bf16.msra.mxu0 %v342
  %1310 = vmatpush.bf16.msra.mxu0 %v340
  %1311 = vmatmul.bf16.gmra.mxu0 %v830
  %v1312 = vpop.f32.mrf.mxu0
  %v1313 = vadd.f32 %v1249, %v1312
  %v1314 = vpop.f32.mrf.mxu0
  %v1315 = vadd.f32 %v1251, %v1314
  %1316 = vmatmul.bf16.gmra.mxu0 %v839
  %v1317 = vpop.f32.mrf.mxu0
  %v1318 = vadd.f32 %v1254, %v1317
  %v1319 = vpop.f32.mrf.mxu0
  %v1320 = vadd.f32 %v1256, %v1319
  %1321 = vmatmul.bf16.gmra.mxu0 %v848
  %v1322 = vpop.f32.mrf.mxu0
  %v1323 = vadd.f32 %v1259, %v1322
  %v1324 = vpop.f32.mrf.mxu0
  %v1325 = vadd.f32 %v1261, %v1324
  %1326 = vmatmul.bf16.gmra.mxu0 %v857
  %v1327 = vpop.f32.mrf.mxu0
  %v1328 = vadd.f32 %v1264, %v1327
  %v1329 = vpop.f32.mrf.mxu0
  %v1330 = vadd.f32 %v1266, %v1329
  %1331 = vmatmul.bf16.gmra.mxu0 %v866
  %v1332 = vpop.f32.mrf.mxu0
  %v1333 = vadd.f32 %v1269, %v1332
  %v1334 = vpop.f32.mrf.mxu0
  %v1335 = vadd.f32 %v1271, %v1334
  %1336 = vmatmul.bf16.gmra.mxu0 %v875
  %v1337 = vpop.f32.mrf.mxu0
  %v1338 = vadd.f32 %v1274, %v1337
  %v1339 = vpop.f32.mrf.mxu0
  %v1340 = vadd.f32 %v1276, %v1339
  %1341 = vmatmul.bf16.gmra.mxu0 %v884
  %v1342 = vpop.f32.mrf.mxu0
  %v1343 = vadd.f32 %v1279, %v1342
  %v1344 = vpop.f32.mrf.mxu0
  %v1345 = vadd.f32 %v1281, %v1344
  %1346 = vmatmul.bf16.gmra.mxu0 %v893
  %v1347 = vpop.f32.mrf.mxu0
  %v1348 = vadd.f32 %v1284, %v1347
  %v1349 = vpop.f32.mrf.mxu0
  %v1350 = vadd.f32 %v1286, %v1349
  %1351 = vmatmul.bf16.gmra.mxu0 %v902
  %v1352 = vpop.f32.mrf.mxu0
  %v1353 = vadd.f32 %v1289, %v1352
  %v1354 = vpop.f32.mrf.mxu0
  %v1355 = vadd.f32 %v1291, %v1354
  %1356 = vmatmul.bf16.gmra.mxu0 %v911
  %v1357 = vpop.f32.mrf.mxu0
  %v1358 = vadd.f32 %v1294, %v1357
  %v1359 = vpop.f32.mrf.mxu0
  %v1360 = vadd.f32 %v1296, %v1359
  %1361 = vmatmul.bf16.gmra.mxu0 %v920
  %v1362 = vpop.f32.mrf.mxu0
  %v1363 = vadd.f32 %v1299, %v1362
  %v1364 = vpop.f32.mrf.mxu0
  %v1365 = vadd.f32 %v1301, %v1364
  %1366 = vdwg.mxu0
  %1367 = vmatpush.bf16.msra.mxu0 %v370
  %1368 = vmatpush.bf16.msra.mxu0 %v368
  %1369 = vmatpush.bf16.msra.mxu0 %v366
  %1370 = vmatpush.bf16.msra.mxu0 %v364
  %1371 = vmatpush.bf16.msra.mxu0 %v362
  %1372 = vmatpush.bf16.msra.mxu0 %v360
  %1373 = vmatpush.bf16.msra.mxu0 %v358
  %1374 = vmatpush.bf16.msra.mxu0 %v356
  %1375 = vmatmul.bf16.gmra.mxu0 %v831
  %v1376 = vpop.f32.mrf.mxu0
  %v1377 = vadd.f32 %v1313, %v1376
  %v1378 = vpop.f32.mrf.mxu0
  %v1379 = vadd.f32 %v1315, %v1378
  %1380 = vmatmul.bf16.gmra.mxu0 %v840
  %v1381 = vpop.f32.mrf.mxu0
  %v1382 = vadd.f32 %v1318, %v1381
  %v1383 = vpop.f32.mrf.mxu0
  %v1384 = vadd.f32 %v1320, %v1383
  %1385 = vmatmul.bf16.gmra.mxu0 %v849
  %v1386 = vpop.f32.mrf.mxu0
  %v1387 = vadd.f32 %v1323, %v1386
  %v1388 = vpop.f32.mrf.mxu0
  %v1389 = vadd.f32 %v1325, %v1388
  %1390 = vmatmul.bf16.gmra.mxu0 %v858
  %v1391 = vpop.f32.mrf.mxu0
  %v1392 = vadd.f32 %v1328, %v1391
  %v1393 = vpop.f32.mrf.mxu0
  %v1394 = vadd.f32 %v1330, %v1393
  %1395 = vmatmul.bf16.gmra.mxu0 %v867
  %v1396 = vpop.f32.mrf.mxu0
  %v1397 = vadd.f32 %v1333, %v1396
  %v1398 = vpop.f32.mrf.mxu0
  %v1399 = vadd.f32 %v1335, %v1398
  %1400 = vmatmul.bf16.gmra.mxu0 %v876
  %v1401 = vpop.f32.mrf.mxu0
  %v1402 = vadd.f32 %v1338, %v1401
  %v1403 = vpop.f32.mrf.mxu0
  %v1404 = vadd.f32 %v1340, %v1403
  %1405 = vmatmul.bf16.gmra.mxu0 %v885
  %v1406 = vpop.f32.mrf.mxu0
  %v1407 = vadd.f32 %v1343, %v1406
  %v1408 = vpop.f32.mrf.mxu0
  %v1409 = vadd.f32 %v1345, %v1408
  %1410 = vmatmul.bf16.gmra.mxu0 %v894
  %v1411 = vpop.f32.mrf.mxu0
  %v1412 = vadd.f32 %v1348, %v1411
  %v1413 = vpop.f32.mrf.mxu0
  %v1414 = vadd.f32 %v1350, %v1413
  %1415 = vmatmul.bf16.gmra.mxu0 %v903
  %v1416 = vpop.f32.mrf.mxu0
  %v1417 = vadd.f32 %v1353, %v1416
  %v1418 = vpop.f32.mrf.mxu0
  %v1419 = vadd.f32 %v1355, %v1418
  %1420 = vmatmul.bf16.gmra.mxu0 %v912
  %v1421 = vpop.f32.mrf.mxu0
  %v1422 = vadd.f32 %v1358, %v1421
  %v1423 = vpop.f32.mrf.mxu0
  %v1424 = vadd.f32 %v1360, %v1423
  %1425 = vmatmul.bf16.gmra.mxu0 %v921
  %v1426 = vpop.f32.mrf.mxu0
  %v1427 = vadd.f32 %v1363, %v1426
  %v1428 = vpop.f32.mrf.mxu0
  %v1429 = vadd.f32 %v1365, %v1428
  %1430 = vdwg.mxu0
  %1431 = vmatpush.bf16.msra.mxu0 %v386
  %1432 = vmatpush.bf16.msra.mxu0 %v384
  %1433 = vmatpush.bf16.msra.mxu0 %v382
  %1434 = vmatpush.bf16.msra.mxu0 %v380
  %1435 = vmatpush.bf16.msra.mxu0 %v378
  %1436 = vmatpush.bf16.msra.mxu0 %v376
  %1437 = vmatpush.bf16.msra.mxu0 %v374
  %1438 = vmatpush.bf16.msra.mxu0 %v372
  %1439 = vmatmul.bf16.gmra.mxu0 %v832
  %v1440 = vpop.f32.mrf.mxu0
  %v1441 = vadd.f32 %v1377, %v1440
  %v1442 = vpop.f32.mrf.mxu0
  %v1443 = vadd.f32 %v1379, %v1442
  %1444 = vmatmul.bf16.gmra.mxu0 %v841
  %v1445 = vpop.f32.mrf.mxu0
  %v1446 = vadd.f32 %v1382, %v1445
  %v1447 = vpop.f32.mrf.mxu0
  %v1448 = vadd.f32 %v1384, %v1447
  %1449 = vmatmul.bf16.gmra.mxu0 %v850
  %v1450 = vpop.f32.mrf.mxu0
  %v1451 = vadd.f32 %v1387, %v1450
  %v1452 = vpop.f32.mrf.mxu0
  %v1453 = vadd.f32 %v1389, %v1452
  %1454 = vmatmul.bf16.gmra.mxu0 %v859
  %v1455 = vpop.f32.mrf.mxu0
  %v1456 = vadd.f32 %v1392, %v1455
  %v1457 = vpop.f32.mrf.mxu0
  %v1458 = vadd.f32 %v1394, %v1457
  %1459 = vmatmul.bf16.gmra.mxu0 %v868
  %v1460 = vpop.f32.mrf.mxu0
  %v1461 = vadd.f32 %v1397, %v1460
  %v1462 = vpop.f32.mrf.mxu0
  %v1463 = vadd.f32 %v1399, %v1462
  %1464 = vmatmul.bf16.gmra.mxu0 %v877
  %v1465 = vpop.f32.mrf.mxu0
  %v1466 = vadd.f32 %v1402, %v1465
  %v1467 = vpop.f32.mrf.mxu0
  %v1468 = vadd.f32 %v1404, %v1467
  %1469 = vmatmul.bf16.gmra.mxu0 %v886
  %v1470 = vpop.f32.mrf.mxu0
  %v1471 = vadd.f32 %v1407, %v1470
  %v1472 = vpop.f32.mrf.mxu0
  %v1473 = vadd.f32 %v1409, %v1472
  %1474 = vmatmul.bf16.gmra.mxu0 %v895
  %v1475 = vpop.f32.mrf.mxu0
  %v1476 = vadd.f32 %v1412, %v1475
  %v1477 = vpop.f32.mrf.mxu0
  %v1478 = vadd.f32 %v1414, %v1477
  %1479 = vmatmul.bf16.gmra.mxu0 %v904
  %v1480 = vpop.f32.mrf.mxu0
  %v1481 = vadd.f32 %v1417, %v1480
  %v1482 = vpop.f32.mrf.mxu0
  %v1483 = vadd.f32 %v1419, %v1482
  %1484 = vmatmul.bf16.gmra.mxu0 %v913
  %v1485 = vpop.f32.mrf.mxu0
  %v1486 = vadd.f32 %v1422, %v1485
  %v1487 = vpop.f32.mrf.mxu0
  %v1488 = vadd.f32 %v1424, %v1487
  %1489 = vmatmul.bf16.gmra.mxu0 %v922
  %v1490 = vpop.f32.mrf.mxu0
  %v1491 = vadd.f32 %v1427, %v1490
  %v1492 = vpop.f32.mrf.mxu0
  %v1493 = vadd.f32 %v1429, %v1492
  %1494 = vdwg.mxu0
  %1495 = vmatpush.bf16.msra.mxu0 %v402
  %1496 = vmatpush.bf16.msra.mxu0 %v400
  %1497 = vmatpush.bf16.msra.mxu0 %v398
  %1498 = vmatpush.bf16.msra.mxu0 %v396
  %1499 = vmatpush.bf16.msra.mxu0 %v394
  %1500 = vmatpush.bf16.msra.mxu0 %v392
  %1501 = vmatpush.bf16.msra.mxu0 %v390
  %1502 = vmatpush.bf16.msra.mxu0 %v388
  %1503 = vmatmul.bf16.gmra.mxu0 %v833
  %v1504 = vpop.f32.mrf.mxu0
  %v1505 = vadd.f32 %v1441, %v1504
  %v1506 = vpop.f32.mrf.mxu0
  %v1507 = vadd.f32 %v1443, %v1506
  %1508 = vmatmul.bf16.gmra.mxu0 %v842
  %v1509 = vpop.f32.mrf.mxu0
  %v1510 = vadd.f32 %v1446, %v1509
  %v1511 = vpop.f32.mrf.mxu0
  %v1512 = vadd.f32 %v1448, %v1511
  %1513 = vmatmul.bf16.gmra.mxu0 %v851
  %v1514 = vpop.f32.mrf.mxu0
  %v1515 = vadd.f32 %v1451, %v1514
  %v1516 = vpop.f32.mrf.mxu0
  %v1517 = vadd.f32 %v1453, %v1516
  %1518 = vmatmul.bf16.gmra.mxu0 %v860
  %v1519 = vpop.f32.mrf.mxu0
  %v1520 = vadd.f32 %v1456, %v1519
  %v1521 = vpop.f32.mrf.mxu0
  %v1522 = vadd.f32 %v1458, %v1521
  %1523 = vmatmul.bf16.gmra.mxu0 %v869
  %v1524 = vpop.f32.mrf.mxu0
  %v1525 = vadd.f32 %v1461, %v1524
  %v1526 = vpop.f32.mrf.mxu0
  %v1527 = vadd.f32 %v1463, %v1526
  %1528 = vmatmul.bf16.gmra.mxu0 %v878
  %v1529 = vpop.f32.mrf.mxu0
  %v1530 = vadd.f32 %v1466, %v1529
  %v1531 = vpop.f32.mrf.mxu0
  %v1532 = vadd.f32 %v1468, %v1531
  %1533 = vmatmul.bf16.gmra.mxu0 %v887
  %v1534 = vpop.f32.mrf.mxu0
  %v1535 = vadd.f32 %v1471, %v1534
  %v1536 = vpop.f32.mrf.mxu0
  %v1537 = vadd.f32 %v1473, %v1536
  %1538 = vmatmul.bf16.gmra.mxu0 %v896
  %v1539 = vpop.f32.mrf.mxu0
  %v1540 = vadd.f32 %v1476, %v1539
  %v1541 = vpop.f32.mrf.mxu0
  %v1542 = vadd.f32 %v1478, %v1541
  %1543 = vmatmul.bf16.gmra.mxu0 %v905
  %v1544 = vpop.f32.mrf.mxu0
  %v1545 = vadd.f32 %v1481, %v1544
  %v1546 = vpop.f32.mrf.mxu0
  %v1547 = vadd.f32 %v1483, %v1546
  %1548 = vmatmul.bf16.gmra.mxu0 %v914
  %v1549 = vpop.f32.mrf.mxu0
  %v1550 = vadd.f32 %v1486, %v1549
  %v1551 = vpop.f32.mrf.mxu0
  %v1552 = vadd.f32 %v1488, %v1551
  %1553 = vmatmul.bf16.gmra.mxu0 %v923
  %v1554 = vpop.f32.mrf.mxu0
  %v1555 = vadd.f32 %v1491, %v1554
  %v1556 = vpop.f32.mrf.mxu0
  %v1557 = vadd.f32 %v1493, %v1556
  %1558 = vdwg.mxu0
  %1559 = vmatpush.bf16.msra.mxu0 0
  %1560 = vmatpush.bf16.msra.mxu0 0
  %1561 = vmatpush.bf16.msra.mxu0 0
  %1562 = vmatpush.bf16.msra.mxu0 0
  %1563 = vmatpush.bf16.msra.mxu0 0
  %1564 = vmatpush.bf16.msra.mxu0 0
  %1565 = vmatpush.bf16.msra.mxu0 %v406
  %1566 = vmatpush.bf16.msra.mxu0 %v404
  %1567 = vmatmul.bf16.gmra.mxu0 %v1015
  %v1568 = vpop.f32.mrf.mxu0
  %v1569 = vadd.f32 %v1505, %v1568
  %v1570 = vpop.f32.mrf.mxu0
  %v1571 = vadd.f32 %v1507, %v1570
  %1572 = vmatmul.bf16.gmra.mxu0 %v1018
  %v1573 = vpop.f32.mrf.mxu0
  %v1574 = vadd.f32 %v1510, %v1573
  %v1575 = vpop.f32.mrf.mxu0
  %v1576 = vadd.f32 %v1512, %v1575
  %1577 = vmatmul.bf16.gmra.mxu0 %v1021
  %v1578 = vpop.f32.mrf.mxu0
  %v1579 = vadd.f32 %v1515, %v1578
  %v1580 = vpop.f32.mrf.mxu0
  %v1581 = vadd.f32 %v1517, %v1580
  %1582 = vmatmul.bf16.gmra.mxu0 %v1024
  %v1583 = vpop.f32.mrf.mxu0
  %v1584 = vadd.f32 %v1520, %v1583
  %v1585 = vpop.f32.mrf.mxu0
  %v1586 = vadd.f32 %v1522, %v1585
  %1587 = vmatmul.bf16.gmra.mxu0 %v1027
  %v1588 = vpop.f32.mrf.mxu0
  %v1589 = vadd.f32 %v1525, %v1588
  %v1590 = vpop.f32.mrf.mxu0
  %v1591 = vadd.f32 %v1527, %v1590
  %1592 = vmatmul.bf16.gmra.mxu0 %v1030
  %v1593 = vpop.f32.mrf.mxu0
  %v1594 = vadd.f32 %v1530, %v1593
  %v1595 = vpop.f32.mrf.mxu0
  %v1596 = vadd.f32 %v1532, %v1595
  %1597 = vmatmul.bf16.gmra.mxu0 %v1033
  %v1598 = vpop.f32.mrf.mxu0
  %v1599 = vadd.f32 %v1535, %v1598
  %v1600 = vpop.f32.mrf.mxu0
  %v1601 = vadd.f32 %v1537, %v1600
  %1602 = vmatmul.bf16.gmra.mxu0 %v1036
  %v1603 = vpop.f32.mrf.mxu0
  %v1604 = vadd.f32 %v1540, %v1603
  %v1605 = vpop.f32.mrf.mxu0
  %v1606 = vadd.f32 %v1542, %v1605
  %1607 = vmatmul.bf16.gmra.mxu0 %v1039
  %v1608 = vpop.f32.mrf.mxu0
  %v1609 = vadd.f32 %v1545, %v1608
  %v1610 = vpop.f32.mrf.mxu0
  %v1611 = vadd.f32 %v1547, %v1610
  %1612 = vmatmul.bf16.gmra.mxu0 %v1042
  %v1613 = vpop.f32.mrf.mxu0
  %v1614 = vadd.f32 %v1550, %v1613
  %v1615 = vpop.f32.mrf.mxu0
  %v1616 = vadd.f32 %v1552, %v1615
  %1617 = vmatmul.bf16.gmra.mxu0 %v1045
  %v1618 = vpop.f32.mrf.mxu0
  %v1619 = vadd.f32 %v1555, %v1618
  %v1620 = vpop.f32.mrf.mxu0
  %v1621 = vadd.f32 %v1557, %v1620
  %1622 = vdwg.mxu0
  %1623 = vmatpush.bf16.msra.mxu0 %v291
  %1624 = vmatpush.bf16.msra.mxu0 %v289
  %1625 = vmatpush.bf16.msra.mxu0 %v287
  %1626 = vmatpush.bf16.msra.mxu0 %v285
  %1627 = vmatpush.bf16.msra.mxu0 %v283
  %1628 = vmatpush.bf16.msra.mxu0 %v281
  %1629 = vmatpush.bf16.msra.mxu0 %v279
  %1630 = vmatpush.bf16.msra.mxu0 %v277
  %1631 = vmatmul.bf16.gmra.mxu0 %v826
  %v1632 = vpop.f32.mrf.mxu0
  %v1633 = vadd.f32 0.0, %v1632
  %v1634 = vpop.f32.mrf.mxu0
  %v1635 = vadd.f32 0.0, %v1634
  %1636 = vmatmul.bf16.gmra.mxu0 %v835
  %v1637 = vpop.f32.mrf.mxu0
  %v1638 = vadd.f32 0.0, %v1637
  %v1639 = vpop.f32.mrf.mxu0
  %v1640 = vadd.f32 0.0, %v1639
  %1641 = vmatmul.bf16.gmra.mxu0 %v844
  %v1642 = vpop.f32.mrf.mxu0
  %v1643 = vadd.f32 0.0, %v1642
  %v1644 = vpop.f32.mrf.mxu0
  %v1645 = vadd.f32 0.0, %v1644
  %1646 = vmatmul.bf16.gmra.mxu0 %v853
  %v1647 = vpop.f32.mrf.mxu0
  %v1648 = vadd.f32 0.0, %v1647
  %v1649 = vpop.f32.mrf.mxu0
  %v1650 = vadd.f32 0.0, %v1649
  %1651 = vmatmul.bf16.gmra.mxu0 %v862
  %v1652 = vpop.f32.mrf.mxu0
  %v1653 = vadd.f32 0.0, %v1652
  %v1654 = vpop.f32.mrf.mxu0
  %v1655 = vadd.f32 0.0, %v1654
  %1656 = vmatmul.bf16.gmra.mxu0 %v871
  %v1657 = vpop.f32.mrf.mxu0
  %v1658 = vadd.f32 0.0, %v1657
  %v1659 = vpop.f32.mrf.mxu0
  %v1660 = vadd.f32 0.0, %v1659
  %1661 = vmatmul.bf16.gmra.mxu0 %v880
  %v1662 = vpop.f32.mrf.mxu0
  %v1663 = vadd.f32 0.0, %v1662
  %v1664 = vpop.f32.mrf.mxu0
  %v1665 = vadd.f32 0.0, %v1664
  %1666 = vmatmul.bf16.gmra.mxu0 %v889
  %v1667 = vpop.f32.mrf.mxu0
  %v1668 = vadd.f32 0.0, %v1667
  %v1669 = vpop.f32.mrf.mxu0
  %v1670 = vadd.f32 0.0, %v1669
  %1671 = vmatmul.bf16.gmra.mxu0 %v898
  %v1672 = vpop.f32.mrf.mxu0
  %v1673 = vadd.f32 0.0, %v1672
  %v1674 = vpop.f32.mrf.mxu0
  %v1675 = vadd.f32 0.0, %v1674
  %1676 = vmatmul.bf16.gmra.mxu0 %v907
  %v1677 = vpop.f32.mrf.mxu0
  %v1678 = vadd.f32 0.0, %v1677
  %v1679 = vpop.f32.mrf.mxu0
  %v1680 = vadd.f32 0.0, %v1679
  %1681 = vmatmul.bf16.gmra.mxu0 %v916
  %v1682 = vpop.f32.mrf.mxu0
  %v1683 = vadd.f32 0.0, %v1682
  %v1684 = vpop.f32.mrf.mxu0
  %v1685 = vadd.f32 0.0, %v1684
  %1686 = vdwg.mxu0
  %1687 = vmatpush.bf16.msra.mxu0 %v307
  %1688 = vmatpush.bf16.msra.mxu0 %v305
  %1689 = vmatpush.bf16.msra.mxu0 %v303
  %1690 = vmatpush.bf16.msra.mxu0 %v301
  %1691 = vmatpush.bf16.msra.mxu0 %v299
  %1692 = vmatpush.bf16.msra.mxu0 %v297
  %1693 = vmatpush.bf16.msra.mxu0 %v295
  %1694 = vmatpush.bf16.msra.mxu0 %v293
  %1695 = vmatmul.bf16.gmra.mxu0 %v827
  %v1696 = vpop.f32.mrf.mxu0
  %v1697 = vadd.f32 %v1633, %v1696
  %v1698 = vpop.f32.mrf.mxu0
  %v1699 = vadd.f32 %v1635, %v1698
  %1700 = vmatmul.bf16.gmra.mxu0 %v836
  %v1701 = vpop.f32.mrf.mxu0
  %v1702 = vadd.f32 %v1638, %v1701
  %v1703 = vpop.f32.mrf.mxu0
  %v1704 = vadd.f32 %v1640, %v1703
  %1705 = vmatmul.bf16.gmra.mxu0 %v845
  %v1706 = vpop.f32.mrf.mxu0
  %v1707 = vadd.f32 %v1643, %v1706
  %v1708 = vpop.f32.mrf.mxu0
  %v1709 = vadd.f32 %v1645, %v1708
  %1710 = vmatmul.bf16.gmra.mxu0 %v854
  %v1711 = vpop.f32.mrf.mxu0
  %v1712 = vadd.f32 %v1648, %v1711
  %v1713 = vpop.f32.mrf.mxu0
  %v1714 = vadd.f32 %v1650, %v1713
  %1715 = vmatmul.bf16.gmra.mxu0 %v863
  %v1716 = vpop.f32.mrf.mxu0
  %v1717 = vadd.f32 %v1653, %v1716
  %v1718 = vpop.f32.mrf.mxu0
  %v1719 = vadd.f32 %v1655, %v1718
  %1720 = vmatmul.bf16.gmra.mxu0 %v872
  %v1721 = vpop.f32.mrf.mxu0
  %v1722 = vadd.f32 %v1658, %v1721
  %v1723 = vpop.f32.mrf.mxu0
  %v1724 = vadd.f32 %v1660, %v1723
  %1725 = vmatmul.bf16.gmra.mxu0 %v881
  %v1726 = vpop.f32.mrf.mxu0
  %v1727 = vadd.f32 %v1663, %v1726
  %v1728 = vpop.f32.mrf.mxu0
  %v1729 = vadd.f32 %v1665, %v1728
  %1730 = vmatmul.bf16.gmra.mxu0 %v890
  %v1731 = vpop.f32.mrf.mxu0
  %v1732 = vadd.f32 %v1668, %v1731
  %v1733 = vpop.f32.mrf.mxu0
  %v1734 = vadd.f32 %v1670, %v1733
  %1735 = vmatmul.bf16.gmra.mxu0 %v899
  %v1736 = vpop.f32.mrf.mxu0
  %v1737 = vadd.f32 %v1673, %v1736
  %v1738 = vpop.f32.mrf.mxu0
  %v1739 = vadd.f32 %v1675, %v1738
  %1740 = vmatmul.bf16.gmra.mxu0 %v908
  %v1741 = vpop.f32.mrf.mxu0
  %v1742 = vadd.f32 %v1678, %v1741
  %v1743 = vpop.f32.mrf.mxu0
  %v1744 = vadd.f32 %v1680, %v1743
  %1745 = vmatmul.bf16.gmra.mxu0 %v917
  %v1746 = vpop.f32.mrf.mxu0
  %v1747 = vadd.f32 %v1683, %v1746
  %v1748 = vpop.f32.mrf.mxu0
  %v1749 = vadd.f32 %v1685, %v1748
  %1750 = vdwg.mxu0
  %1751 = vmatpush.bf16.msra.mxu0 %v323
  %1752 = vmatpush.bf16.msra.mxu0 %v321
  %1753 = vmatpush.bf16.msra.mxu0 %v319
  %1754 = vmatpush.bf16.msra.mxu0 %v317
  %1755 = vmatpush.bf16.msra.mxu0 %v315
  %1756 = vmatpush.bf16.msra.mxu0 %v313
  %1757 = vmatpush.bf16.msra.mxu0 %v311
  %1758 = vmatpush.bf16.msra.mxu0 %v309
  %1759 = vmatmul.bf16.gmra.mxu0 %v828
  %v1760 = vpop.f32.mrf.mxu0
  %v1761 = vadd.f32 %v1697, %v1760
  %v1762 = vpop.f32.mrf.mxu0
  %v1763 = vadd.f32 %v1699, %v1762
  %1764 = vmatmul.bf16.gmra.mxu0 %v837
  %v1765 = vpop.f32.mrf.mxu0
  %v1766 = vadd.f32 %v1702, %v1765
  %v1767 = vpop.f32.mrf.mxu0
  %v1768 = vadd.f32 %v1704, %v1767
  %1769 = vmatmul.bf16.gmra.mxu0 %v846
  %v1770 = vpop.f32.mrf.mxu0
  %v1771 = vadd.f32 %v1707, %v1770
  %v1772 = vpop.f32.mrf.mxu0
  %v1773 = vadd.f32 %v1709, %v1772
  %1774 = vmatmul.bf16.gmra.mxu0 %v855
  %v1775 = vpop.f32.mrf.mxu0
  %v1776 = vadd.f32 %v1712, %v1775
  %v1777 = vpop.f32.mrf.mxu0
  %v1778 = vadd.f32 %v1714, %v1777
  %1779 = vmatmul.bf16.gmra.mxu0 %v864
  %v1780 = vpop.f32.mrf.mxu0
  %v1781 = vadd.f32 %v1717, %v1780
  %v1782 = vpop.f32.mrf.mxu0
  %v1783 = vadd.f32 %v1719, %v1782
  %1784 = vmatmul.bf16.gmra.mxu0 %v873
  %v1785 = vpop.f32.mrf.mxu0
  %v1786 = vadd.f32 %v1722, %v1785
  %v1787 = vpop.f32.mrf.mxu0
  %v1788 = vadd.f32 %v1724, %v1787
  %1789 = vmatmul.bf16.gmra.mxu0 %v882
  %v1790 = vpop.f32.mrf.mxu0
  %v1791 = vadd.f32 %v1727, %v1790
  %v1792 = vpop.f32.mrf.mxu0
  %v1793 = vadd.f32 %v1729, %v1792
  %1794 = vmatmul.bf16.gmra.mxu0 %v891
  %v1795 = vpop.f32.mrf.mxu0
  %v1796 = vadd.f32 %v1732, %v1795
  %v1797 = vpop.f32.mrf.mxu0
  %v1798 = vadd.f32 %v1734, %v1797
  %1799 = vmatmul.bf16.gmra.mxu0 %v900
  %v1800 = vpop.f32.mrf.mxu0
  %v1801 = vadd.f32 %v1737, %v1800
  %v1802 = vpop.f32.mrf.mxu0
  %v1803 = vadd.f32 %v1739, %v1802
  %1804 = vmatmul.bf16.gmra.mxu0 %v909
  %v1805 = vpop.f32.mrf.mxu0
  %v1806 = vadd.f32 %v1742, %v1805
  %v1807 = vpop.f32.mrf.mxu0
  %v1808 = vadd.f32 %v1744, %v1807
  %1809 = vmatmul.bf16.gmra.mxu0 %v918
  %v1810 = vpop.f32.mrf.mxu0
  %v1811 = vadd.f32 %v1747, %v1810
  %v1812 = vpop.f32.mrf.mxu0
  %v1813 = vadd.f32 %v1749, %v1812
  %1814 = vdwg.mxu0
  %1815 = vmatpush.bf16.msra.mxu0 %v339
  %1816 = vmatpush.bf16.msra.mxu0 %v337
  %1817 = vmatpush.bf16.msra.mxu0 %v335
  %1818 = vmatpush.bf16.msra.mxu0 %v333
  %1819 = vmatpush.bf16.msra.mxu0 %v331
  %1820 = vmatpush.bf16.msra.mxu0 %v329
  %1821 = vmatpush.bf16.msra.mxu0 %v327
  %1822 = vmatpush.bf16.msra.mxu0 %v325
  %1823 = vmatmul.bf16.gmra.mxu0 %v829
  %v1824 = vpop.f32.mrf.mxu0
  %v1825 = vadd.f32 %v1761, %v1824
  %v1826 = vpop.f32.mrf.mxu0
  %v1827 = vadd.f32 %v1763, %v1826
  %1828 = vmatmul.bf16.gmra.mxu0 %v838
  %v1829 = vpop.f32.mrf.mxu0
  %v1830 = vadd.f32 %v1766, %v1829
  %v1831 = vpop.f32.mrf.mxu0
  %v1832 = vadd.f32 %v1768, %v1831
  %1833 = vmatmul.bf16.gmra.mxu0 %v847
  %v1834 = vpop.f32.mrf.mxu0
  %v1835 = vadd.f32 %v1771, %v1834
  %v1836 = vpop.f32.mrf.mxu0
  %v1837 = vadd.f32 %v1773, %v1836
  %1838 = vmatmul.bf16.gmra.mxu0 %v856
  %v1839 = vpop.f32.mrf.mxu0
  %v1840 = vadd.f32 %v1776, %v1839
  %v1841 = vpop.f32.mrf.mxu0
  %v1842 = vadd.f32 %v1778, %v1841
  %1843 = vmatmul.bf16.gmra.mxu0 %v865
  %v1844 = vpop.f32.mrf.mxu0
  %v1845 = vadd.f32 %v1781, %v1844
  %v1846 = vpop.f32.mrf.mxu0
  %v1847 = vadd.f32 %v1783, %v1846
  %1848 = vmatmul.bf16.gmra.mxu0 %v874
  %v1849 = vpop.f32.mrf.mxu0
  %v1850 = vadd.f32 %v1786, %v1849
  %v1851 = vpop.f32.mrf.mxu0
  %v1852 = vadd.f32 %v1788, %v1851
  %1853 = vmatmul.bf16.gmra.mxu0 %v883
  %v1854 = vpop.f32.mrf.mxu0
  %v1855 = vadd.f32 %v1791, %v1854
  %v1856 = vpop.f32.mrf.mxu0
  %v1857 = vadd.f32 %v1793, %v1856
  %1858 = vmatmul.bf16.gmra.mxu0 %v892
  %v1859 = vpop.f32.mrf.mxu0
  %v1860 = vadd.f32 %v1796, %v1859
  %v1861 = vpop.f32.mrf.mxu0
  %v1862 = vadd.f32 %v1798, %v1861
  %1863 = vmatmul.bf16.gmra.mxu0 %v901
  %v1864 = vpop.f32.mrf.mxu0
  %v1865 = vadd.f32 %v1801, %v1864
  %v1866 = vpop.f32.mrf.mxu0
  %v1867 = vadd.f32 %v1803, %v1866
  %1868 = vmatmul.bf16.gmra.mxu0 %v910
  %v1869 = vpop.f32.mrf.mxu0
  %v1870 = vadd.f32 %v1806, %v1869
  %v1871 = vpop.f32.mrf.mxu0
  %v1872 = vadd.f32 %v1808, %v1871
  %1873 = vmatmul.bf16.gmra.mxu0 %v919
  %v1874 = vpop.f32.mrf.mxu0
  %v1875 = vadd.f32 %v1811, %v1874
  %v1876 = vpop.f32.mrf.mxu0
  %v1877 = vadd.f32 %v1813, %v1876
  %1878 = vdwg.mxu0
  %1879 = vmatpush.bf16.msra.mxu0 %v355
  %1880 = vmatpush.bf16.msra.mxu0 %v353
  %1881 = vmatpush.bf16.msra.mxu0 %v351
  %1882 = vmatpush.bf16.msra.mxu0 %v349
  %1883 = vmatpush.bf16.msra.mxu0 %v347
  %1884 = vmatpush.bf16.msra.mxu0 %v345
  %1885 = vmatpush.bf16.msra.mxu0 %v343
  %1886 = vmatpush.bf16.msra.mxu0 %v341
  %1887 = vmatmul.bf16.gmra.mxu0 %v830
  %v1888 = vpop.f32.mrf.mxu0
  %v1889 = vadd.f32 %v1825, %v1888
  %v1890 = vpop.f32.mrf.mxu0
  %v1891 = vadd.f32 %v1827, %v1890
  %1892 = vmatmul.bf16.gmra.mxu0 %v839
  %v1893 = vpop.f32.mrf.mxu0
  %v1894 = vadd.f32 %v1830, %v1893
  %v1895 = vpop.f32.mrf.mxu0
  %v1896 = vadd.f32 %v1832, %v1895
  %1897 = vmatmul.bf16.gmra.mxu0 %v848
  %v1898 = vpop.f32.mrf.mxu0
  %v1899 = vadd.f32 %v1835, %v1898
  %v1900 = vpop.f32.mrf.mxu0
  %v1901 = vadd.f32 %v1837, %v1900
  %1902 = vmatmul.bf16.gmra.mxu0 %v857
  %v1903 = vpop.f32.mrf.mxu0
  %v1904 = vadd.f32 %v1840, %v1903
  %v1905 = vpop.f32.mrf.mxu0
  %v1906 = vadd.f32 %v1842, %v1905
  %1907 = vmatmul.bf16.gmra.mxu0 %v866
  %v1908 = vpop.f32.mrf.mxu0
  %v1909 = vadd.f32 %v1845, %v1908
  %v1910 = vpop.f32.mrf.mxu0
  %v1911 = vadd.f32 %v1847, %v1910
  %1912 = vmatmul.bf16.gmra.mxu0 %v875
  %v1913 = vpop.f32.mrf.mxu0
  %v1914 = vadd.f32 %v1850, %v1913
  %v1915 = vpop.f32.mrf.mxu0
  %v1916 = vadd.f32 %v1852, %v1915
  %1917 = vmatmul.bf16.gmra.mxu0 %v884
  %v1918 = vpop.f32.mrf.mxu0
  %v1919 = vadd.f32 %v1855, %v1918
  %v1920 = vpop.f32.mrf.mxu0
  %v1921 = vadd.f32 %v1857, %v1920
  %1922 = vmatmul.bf16.gmra.mxu0 %v893
  %v1923 = vpop.f32.mrf.mxu0
  %v1924 = vadd.f32 %v1860, %v1923
  %v1925 = vpop.f32.mrf.mxu0
  %v1926 = vadd.f32 %v1862, %v1925
  %1927 = vmatmul.bf16.gmra.mxu0 %v902
  %v1928 = vpop.f32.mrf.mxu0
  %v1929 = vadd.f32 %v1865, %v1928
  %v1930 = vpop.f32.mrf.mxu0
  %v1931 = vadd.f32 %v1867, %v1930
  %1932 = vmatmul.bf16.gmra.mxu0 %v911
  %v1933 = vpop.f32.mrf.mxu0
  %v1934 = vadd.f32 %v1870, %v1933
  %v1935 = vpop.f32.mrf.mxu0
  %v1936 = vadd.f32 %v1872, %v1935
  %1937 = vmatmul.bf16.gmra.mxu0 %v920
  %v1938 = vpop.f32.mrf.mxu0
  %v1939 = vadd.f32 %v1875, %v1938
  %v1940 = vpop.f32.mrf.mxu0
  %v1941 = vadd.f32 %v1877, %v1940
  %1942 = vdwg.mxu0
  %1943 = vmatpush.bf16.msra.mxu0 %v371
  %1944 = vmatpush.bf16.msra.mxu0 %v369
  %1945 = vmatpush.bf16.msra.mxu0 %v367
  %1946 = vmatpush.bf16.msra.mxu0 %v365
  %1947 = vmatpush.bf16.msra.mxu0 %v363
  %1948 = vmatpush.bf16.msra.mxu0 %v361
  %1949 = vmatpush.bf16.msra.mxu0 %v359
  %1950 = vmatpush.bf16.msra.mxu0 %v357
  %1951 = vmatmul.bf16.gmra.mxu0 %v831
  %v1952 = vpop.f32.mrf.mxu0
  %v1953 = vadd.f32 %v1889, %v1952
  %v1954 = vpop.f32.mrf.mxu0
  %v1955 = vadd.f32 %v1891, %v1954
  %1956 = vmatmul.bf16.gmra.mxu0 %v840
  %v1957 = vpop.f32.mrf.mxu0
  %v1958 = vadd.f32 %v1894, %v1957
  %v1959 = vpop.f32.mrf.mxu0
  %v1960 = vadd.f32 %v1896, %v1959
  %1961 = vmatmul.bf16.gmra.mxu0 %v849
  %v1962 = vpop.f32.mrf.mxu0
  %v1963 = vadd.f32 %v1899, %v1962
  %v1964 = vpop.f32.mrf.mxu0
  %v1965 = vadd.f32 %v1901, %v1964
  %1966 = vmatmul.bf16.gmra.mxu0 %v858
  %v1967 = vpop.f32.mrf.mxu0
  %v1968 = vadd.f32 %v1904, %v1967
  %v1969 = vpop.f32.mrf.mxu0
  %v1970 = vadd.f32 %v1906, %v1969
  %1971 = vmatmul.bf16.gmra.mxu0 %v867
  %v1972 = vpop.f32.mrf.mxu0
  %v1973 = vadd.f32 %v1909, %v1972
  %v1974 = vpop.f32.mrf.mxu0
  %v1975 = vadd.f32 %v1911, %v1974
  %1976 = vmatmul.bf16.gmra.mxu0 %v876
  %v1977 = vpop.f32.mrf.mxu0
  %v1978 = vadd.f32 %v1914, %v1977
  %v1979 = vpop.f32.mrf.mxu0
  %v1980 = vadd.f32 %v1916, %v1979
  %1981 = vmatmul.bf16.gmra.mxu0 %v885
  %v1982 = vpop.f32.mrf.mxu0
  %v1983 = vadd.f32 %v1919, %v1982
  %v1984 = vpop.f32.mrf.mxu0
  %v1985 = vadd.f32 %v1921, %v1984
  %1986 = vmatmul.bf16.gmra.mxu0 %v894
  %v1987 = vpop.f32.mrf.mxu0
  %v1988 = vadd.f32 %v1924, %v1987
  %v1989 = vpop.f32.mrf.mxu0
  %v1990 = vadd.f32 %v1926, %v1989
  %1991 = vmatmul.bf16.gmra.mxu0 %v903
  %v1992 = vpop.f32.mrf.mxu0
  %v1993 = vadd.f32 %v1929, %v1992
  %v1994 = vpop.f32.mrf.mxu0
  %v1995 = vadd.f32 %v1931, %v1994
  %1996 = vmatmul.bf16.gmra.mxu0 %v912
  %v1997 = vpop.f32.mrf.mxu0
  %v1998 = vadd.f32 %v1934, %v1997
  %v1999 = vpop.f32.mrf.mxu0
  %v2000 = vadd.f32 %v1936, %v1999
  %2001 = vmatmul.bf16.gmra.mxu0 %v921
  %v2002 = vpop.f32.mrf.mxu0
  %v2003 = vadd.f32 %v1939, %v2002
  %v2004 = vpop.f32.mrf.mxu0
  %v2005 = vadd.f32 %v1941, %v2004
  %2006 = vdwg.mxu0
  %2007 = vmatpush.bf16.msra.mxu0 %v387
  %2008 = vmatpush.bf16.msra.mxu0 %v385
  %2009 = vmatpush.bf16.msra.mxu0 %v383
  %2010 = vmatpush.bf16.msra.mxu0 %v381
  %2011 = vmatpush.bf16.msra.mxu0 %v379
  %2012 = vmatpush.bf16.msra.mxu0 %v377
  %2013 = vmatpush.bf16.msra.mxu0 %v375
  %2014 = vmatpush.bf16.msra.mxu0 %v373
  %2015 = vmatmul.bf16.gmra.mxu0 %v832
  %v2016 = vpop.f32.mrf.mxu0
  %v2017 = vadd.f32 %v1953, %v2016
  %v2018 = vpop.f32.mrf.mxu0
  %v2019 = vadd.f32 %v1955, %v2018
  %2020 = vmatmul.bf16.gmra.mxu0 %v841
  %v2021 = vpop.f32.mrf.mxu0
  %v2022 = vadd.f32 %v1958, %v2021
  %v2023 = vpop.f32.mrf.mxu0
  %v2024 = vadd.f32 %v1960, %v2023
  %2025 = vmatmul.bf16.gmra.mxu0 %v850
  %v2026 = vpop.f32.mrf.mxu0
  %v2027 = vadd.f32 %v1963, %v2026
  %v2028 = vpop.f32.mrf.mxu0
  %v2029 = vadd.f32 %v1965, %v2028
  %2030 = vmatmul.bf16.gmra.mxu0 %v859
  %v2031 = vpop.f32.mrf.mxu0
  %v2032 = vadd.f32 %v1968, %v2031
  %v2033 = vpop.f32.mrf.mxu0
  %v2034 = vadd.f32 %v1970, %v2033
  %2035 = vmatmul.bf16.gmra.mxu0 %v868
  %v2036 = vpop.f32.mrf.mxu0
  %v2037 = vadd.f32 %v1973, %v2036
  %v2038 = vpop.f32.mrf.mxu0
  %v2039 = vadd.f32 %v1975, %v2038
  %2040 = vmatmul.bf16.gmra.mxu0 %v877
  %v2041 = vpop.f32.mrf.mxu0
  %v2042 = vadd.f32 %v1978, %v2041
  %v2043 = vpop.f32.mrf.mxu0
  %v2044 = vadd.f32 %v1980, %v2043
  %2045 = vmatmul.bf16.gmra.mxu0 %v886
  %v2046 = vpop.f32.mrf.mxu0
  %v2047 = vadd.f32 %v1983, %v2046
  %v2048 = vpop.f32.mrf.mxu0
  %v2049 = vadd.f32 %v1985, %v2048
  %2050 = vmatmul.bf16.gmra.mxu0 %v895
  %v2051 = vpop.f32.mrf.mxu0
  %v2052 = vadd.f32 %v1988, %v2051
  %v2053 = vpop.f32.mrf.mxu0
  %v2054 = vadd.f32 %v1990, %v2053
  %2055 = vmatmul.bf16.gmra.mxu0 %v904
  %v2056 = vpop.f32.mrf.mxu0
  %v2057 = vadd.f32 %v1993, %v2056
  %v2058 = vpop.f32.mrf.mxu0
  %v2059 = vadd.f32 %v1995, %v2058
  %2060 = vmatmul.bf16.gmra.mxu0 %v913
  %v2061 = vpop.f32.mrf.mxu0
  %v2062 = vadd.f32 %v1998, %v2061
  %v2063 = vpop.f32.mrf.mxu0
  %v2064 = vadd.f32 %v2000, %v2063
  %2065 = vmatmul.bf16.gmra.mxu0 %v922
  %v2066 = vpop.f32.mrf.mxu0
  %v2067 = vadd.f32 %v2003, %v2066
  %v2068 = vpop.f32.mrf.mxu0
  %v2069 = vadd.f32 %v2005, %v2068
  %2070 = vdwg.mxu0
  %2071 = vmatpush.bf16.msra.mxu0 %v403
  %2072 = vmatpush.bf16.msra.mxu0 %v401
  %2073 = vmatpush.bf16.msra.mxu0 %v399
  %2074 = vmatpush.bf16.msra.mxu0 %v397
  %2075 = vmatpush.bf16.msra.mxu0 %v395
  %2076 = vmatpush.bf16.msra.mxu0 %v393
  %2077 = vmatpush.bf16.msra.mxu0 %v391
  %2078 = vmatpush.bf16.msra.mxu0 %v389
  %2079 = vmatmul.bf16.gmra.mxu0 %v833
  %v2080 = vpop.f32.mrf.mxu0
  %v2081 = vadd.f32 %v2017, %v2080
  %v2082 = vpop.f32.mrf.mxu0
  %v2083 = vadd.f32 %v2019, %v2082
  %2084 = vmatmul.bf16.gmra.mxu0 %v842
  %v2085 = vpop.f32.mrf.mxu0
  %v2086 = vadd.f32 %v2022, %v2085
  %v2087 = vpop.f32.mrf.mxu0
  %v2088 = vadd.f32 %v2024, %v2087
  %2089 = vmatmul.bf16.gmra.mxu0 %v851
  %v2090 = vpop.f32.mrf.mxu0
  %v2091 = vadd.f32 %v2027, %v2090
  %v2092 = vpop.f32.mrf.mxu0
  %v2093 = vadd.f32 %v2029, %v2092
  %2094 = vmatmul.bf16.gmra.mxu0 %v860
  %v2095 = vpop.f32.mrf.mxu0
  %v2096 = vadd.f32 %v2032, %v2095
  %v2097 = vpop.f32.mrf.mxu0
  %v2098 = vadd.f32 %v2034, %v2097
  %2099 = vmatmul.bf16.gmra.mxu0 %v869
  %v2100 = vpop.f32.mrf.mxu0
  %v2101 = vadd.f32 %v2037, %v2100
  %v2102 = vpop.f32.mrf.mxu0
  %v2103 = vadd.f32 %v2039, %v2102
  %2104 = vmatmul.bf16.gmra.mxu0 %v878
  %v2105 = vpop.f32.mrf.mxu0
  %v2106 = vadd.f32 %v2042, %v2105
  %v2107 = vpop.f32.mrf.mxu0
  %v2108 = vadd.f32 %v2044, %v2107
  %2109 = vmatmul.bf16.gmra.mxu0 %v887
  %v2110 = vpop.f32.mrf.mxu0
  %v2111 = vadd.f32 %v2047, %v2110
  %v2112 = vpop.f32.mrf.mxu0
  %v2113 = vadd.f32 %v2049, %v2112
  %2114 = vmatmul.bf16.gmra.mxu0 %v896
  %v2115 = vpop.f32.mrf.mxu0
  %v2116 = vadd.f32 %v2052, %v2115
  %v2117 = vpop.f32.mrf.mxu0
  %v2118 = vadd.f32 %v2054, %v2117
  %2119 = vmatmul.bf16.gmra.mxu0 %v905
  %v2120 = vpop.f32.mrf.mxu0
  %v2121 = vadd.f32 %v2057, %v2120
  %v2122 = vpop.f32.mrf.mxu0
  %v2123 = vadd.f32 %v2059, %v2122
  %2124 = vmatmul.bf16.gmra.mxu0 %v914
  %v2125 = vpop.f32.mrf.mxu0
  %v2126 = vadd.f32 %v2062, %v2125
  %v2127 = vpop.f32.mrf.mxu0
  %v2128 = vadd.f32 %v2064, %v2127
  %2129 = vmatmul.bf16.gmra.mxu0 %v923
  %v2130 = vpop.f32.mrf.mxu0
  %v2131 = vadd.f32 %v2067, %v2130
  %v2132 = vpop.f32.mrf.mxu0
  %v2133 = vadd.f32 %v2069, %v2132
  %2134 = vdwg.mxu0
  %2135 = vmatpush.bf16.msra.mxu0 0
  %2136 = vmatpush.bf16.msra.mxu0 0
  %2137 = vmatpush.bf16.msra.mxu0 0
  %2138 = vmatpush.bf16.msra.mxu0 0
  %2139 = vmatpush.bf16.msra.mxu0 0
  %2140 = vmatpush.bf16.msra.mxu0 0
  %2141 = vmatpush.bf16.msra.mxu0 %v407
  %2142 = vmatpush.bf16.msra.mxu0 %v405
  %2143 = vmatmul.bf16.gmra.mxu0 %v1015
  %v2144 = vpop.f32.mrf.mxu0
  %v2145 = vadd.f32 %v2081, %v2144
  %v2146 = vpop.f32.mrf.mxu0
  %v2147 = vadd.f32 %v2083, %v2146
  %2148 = vmatmul.bf16.gmra.mxu0 %v1018
  %v2149 = vpop.f32.mrf.mxu0
  %v2150 = vadd.f32 %v2086, %v2149
  %v2151 = vpop.f32.mrf.mxu0
  %v2152 = vadd.f32 %v2088, %v2151
  %2153 = vmatmul.bf16.gmra.mxu0 %v1021
  %v2154 = vpop.f32.mrf.mxu0
  %v2155 = vadd.f32 %v2091, %v2154
  %v2156 = vpop.f32.mrf.mxu0
  %v2157 = vadd.f32 %v2093, %v2156
  %2158 = vmatmul.bf16.gmra.mxu0 %v1024
  %v2159 = vpop.f32.mrf.mxu0
  %v2160 = vadd.f32 %v2096, %v2159
  %v2161 = vpop.f32.mrf.mxu0
  %v2162 = vadd.f32 %v2098, %v2161
  %2163 = vmatmul.bf16.gmra.mxu0 %v1027
  %v2164 = vpop.f32.mrf.mxu0
  %v2165 = vadd.f32 %v2101, %v2164
  %v2166 = vpop.f32.mrf.mxu0
  %v2167 = vadd.f32 %v2103, %v2166
  %2168 = vmatmul.bf16.gmra.mxu0 %v1030
  %v2169 = vpop.f32.mrf.mxu0
  %v2170 = vadd.f32 %v2106, %v2169
  %v2171 = vpop.f32.mrf.mxu0
  %v2172 = vadd.f32 %v2108, %v2171
  %2173 = vmatmul.bf16.gmra.mxu0 %v1033
  %v2174 = vpop.f32.mrf.mxu0
  %v2175 = vadd.f32 %v2111, %v2174
  %v2176 = vpop.f32.mrf.mxu0
  %v2177 = vadd.f32 %v2113, %v2176
  %2178 = vmatmul.bf16.gmra.mxu0 %v1036
  %v2179 = vpop.f32.mrf.mxu0
  %v2180 = vadd.f32 %v2116, %v2179
  %v2181 = vpop.f32.mrf.mxu0
  %v2182 = vadd.f32 %v2118, %v2181
  %2183 = vmatmul.bf16.gmra.mxu0 %v1039
  %v2184 = vpop.f32.mrf.mxu0
  %v2185 = vadd.f32 %v2121, %v2184
  %v2186 = vpop.f32.mrf.mxu0
  %v2187 = vadd.f32 %v2123, %v2186
  %2188 = vmatmul.bf16.gmra.mxu0 %v1042
  %v2189 = vpop.f32.mrf.mxu0
  %v2190 = vadd.f32 %v2126, %v2189
  %v2191 = vpop.f32.mrf.mxu0
  %v2192 = vadd.f32 %v2128, %v2191
  %2193 = vmatmul.bf16.gmra.mxu0 %v1045
  %v2194 = vpop.f32.mrf.mxu0
  %v2195 = vadd.f32 %v2131, %v2194
  %v2196 = vpop.f32.mrf.mxu0
  %v2197 = vadd.f32 %v2133, %v2196
  %2198 = vdwg.mxu0
  %2199 = vst [vmem:[%s2] sm:$0xff] %v1569
  %vm2200 = vcmask 556032
  %2201 = vst.msk [vmem:[%s2 + $0x8] sm:$0xff] %vm2200, %v2145
  %2202 = vst [vmem:[%s2 + $0x10] sm:$0xff] %v1571
  %2203 = vst.msk [vmem:[%s2 + $0x18] sm:$0xff] %vm2200, %v2147
  %2204 = vst [vmem:[%s2 + $0x20] sm:$0xff] %v1574
  %2205 = vst.msk [vmem:[%s2 + $0x28] sm:$0xff] %vm2200, %v2150
  %2206 = vst [vmem:[%s2 + $0x30] sm:$0xff] %v1576
  %2207 = vst.msk [vmem:[%s2 + $0x38] sm:$0xff] %vm2200, %v2152
  %2208 = vst [vmem:[%s2 + $0x40] sm:$0xff] %v1579
  %2209 = vst.msk [vmem:[%s2 + $0x48] sm:$0xff] %vm2200, %v2155
  %2210 = vst [vmem:[%s2 + $0x50] sm:$0xff] %v1581
  %2211 = vst.msk [vmem:[%s2 + $0x58] sm:$0xff] %vm2200, %v2157
  %2212 = vst [vmem:[%s2 + $0x60] sm:$0xff] %v1584
  %2213 = vst.msk [vmem:[%s2 + $0x68] sm:$0xff] %vm2200, %v2160
  %2214 = vst [vmem:[%s2 + $0x70] sm:$0xff] %v1586
  %2215 = vst.msk [vmem:[%s2 + $0x78] sm:$0xff] %vm2200, %v2162
  %2216 = vst [vmem:[%s2 + $0x80] sm:$0xff] %v1589
  %2217 = vst.msk [vmem:[%s2 + $0x88] sm:$0xff] %vm2200, %v2165
  %2218 = vst [vmem:[%s2 + $0x90] sm:$0xff] %v1591
  %2219 = vst.msk [vmem:[%s2 + $0x98] sm:$0xff] %vm2200, %v2167
  %2220 = vst [vmem:[%s2 + $0xa0] sm:$0xff] %v1594
  %2221 = vst.msk [vmem:[%s2 + $0xa8] sm:$0xff] %vm2200, %v2170
  %2222 = vst [vmem:[%s2 + $0xb0] sm:$0xff] %v1596
  %2223 = vst.msk [vmem:[%s2 + $0xb8] sm:$0xff] %vm2200, %v2172
  %2224 = vst [vmem:[%s2 + $0xc0] sm:$0xff] %v1599
  %2225 = vst.msk [vmem:[%s2 + $0xc8] sm:$0xff] %vm2200, %v2175
  %2226 = vst [vmem:[%s2 + $0xd0] sm:$0xff] %v1601
  %2227 = vst.msk [vmem:[%s2 + $0xd8] sm:$0xff] %vm2200, %v2177
  %2228 = vst [vmem:[%s2 + $0xe0] sm:$0xff] %v1604
  %2229 = vst.msk [vmem:[%s2 + $0xe8] sm:$0xff] %vm2200, %v2180
  %2230 = vst [vmem:[%s2 + $0xf0] sm:$0xff] %v1606
  %2231 = vst.msk [vmem:[%s2 + $0xf8] sm:$0xff] %vm2200, %v2182
  %2232 = vst [vmem:[%s2 + $0x100] sm:$0xff] %v1609
  %2233 = vst.msk [vmem:[%s2 + $0x108] sm:$0xff] %vm2200, %v2185
  %2234 = vst [vmem:[%s2 + $0x110] sm:$0xff] %v1611
  %2235 = vst.msk [vmem:[%s2 + $0x118] sm:$0xff] %vm2200, %v2187
  %2236 = vst [vmem:[%s2 + $0x120] sm:$0xff] %v1614
  %2237 = vst.msk [vmem:[%s2 + $0x128] sm:$0xff] %vm2200, %v2190
  %2238 = vst [vmem:[%s2 + $0x130] sm:$0xff] %v1616
  %2239 = vst.msk [vmem:[%s2 + $0x138] sm:$0xff] %vm2200, %v2192
  %2240 = vst [vmem:[%s2 + $0x140] sm:$0xff] %v1619
  %2241 = vst.msk [vmem:[%s2 + $0x148] sm:$0xff] %vm2200, %v2195
  %2242 = vst [vmem:[%s2 + $0x150] sm:$0xff] %v1621
  %2243 = vst.msk [vmem:[%s2 + $0x158] sm:$0xff] %vm2200, %v2197
  // Predicated region
  $region10: #{conv2d_1x1.1} parent=0 // pred_check
    _
  $region11: #{conv2d_1x1.1} parent=0 // pred_check_branch
    %2245 = sbr.rel (0) target = $region13
  $region12: #{conv2d_1x1.1} parent=0 // pred_region
    _
  $region13: #{conv2d_1x1.1} parent=0 // pred_fallthru
    _
  // Predicated region
  $region14: #{conv2d_1x1.1} parent=0 // pred_check
    _
  $region15: #{conv2d_1x1.1} parent=0 // pred_check_branch
    %2247 = sbr.rel (0) target = $region17
  $region16: #{conv2d_1x1.1} parent=0 // pred_region
    _
  $region17: #{conv2d_1x1.1} parent=0 // pred_fallthru
    _

</llo_original>
